<compile_context>
chip_gen: v7x
topology: tpu7x:2x2x1
jax: 0.10.0
libtpu: 0.0.40
codegen_flags: <defaults>
</compile_context>

<pallas_src>
import functools

import jax
import jax.numpy as jnp
from jax.experimental import pallas as pl
from jax.experimental.pallas import tpu as pltpu


# ----------------------------- Pallas kernel ------------------------------- #
def _bilstm_layer_kernel(x_ref, wih_ref, whh_ref, b_ref,
                         out_ref, hN_ref, cN_ref,
                         gx_sc, h_sc, c_sc, *, hidden, seq_len, batch):
    """One LSTM layer, both directions fused. Grid axis = direction (parallel).

    x_ref   : (T*B, Ein)  time-major, rows grouped by timestep (shared by dirs)
    wih_ref : (Ein, 4H)   bf16, direction-selected
    whh_ref : (H, 4H)     bf16, direction-selected
    b_ref   : (1, 4H)     f32  (b_ih + b_hh), direction-selected
    out_ref : (T*B, H)    direction-selected output slab (resident, 1 writeback)
    hN_ref, cN_ref : (B, H) final states for this direction
    gx_sc   : (T*B, 4H)   VMEM scratch — hoisted input projection
    h_sc, c_sc : (B, H)   VMEM scratch — recurrent state
    """
    d = pl.program_id(0)          # 0 = forward in time, 1 = backward
    H, T, B = hidden, seq_len, batch

    # Hoisted, time-independent input projection: a single MXU matmul with
    # M = T*B instead of T tiny matmuls inside the recurrence.
    gx_sc[...] = (jnp.dot(x_ref[...].astype(jnp.bfloat16), wih_ref[...],
                          preferred_element_type=jnp.float32)
                  + b_ref[...])

    whh = whh_ref[...]            # (H, 4H) bf16, loaded once outside the loop
    h_sc[...] = jnp.zeros_like(h_sc)
    c_sc[...] = jnp.zeros_like(c_sc)

    def step(s, carry):
        # Forward direction walks t = s; backward direction walks t = T-1-s.
        tt = s + d * (T - 1 - 2 * s)
        row = pl.multiple_of(tt * B, B)            # sublane-aligned dynamic slice

        h = h_sc[...]
        gates = (gx_sc[pl.ds(row, B), :]
                 + jnp.dot(h.astype(jnp.bfloat16), whh,
                           preferred_element_type=jnp.float32))   # (B, 4H) f32

        i = jax.nn.sigmoid(gates[:, 0 * H:1 * H])
        f = jax.nn.sigmoid(gates[:, 1 * H:2 * H])
        g = jnp.tanh(gates[:, 2 * H:3 * H])
        o = jax.nn.sigmoid(gates[:, 3 * H:4 * H])

        c = f * c_sc[...] + i * g
        h = o * jnp.tanh(c)
        h_sc[...] = h
        c_sc[...] = c
        out_ref[pl.ds(row, B), :] = h              # store into resident slab
        return carry

    jax.lax.fori_loop(0, T, step, 0, unroll=True)

    hN_ref[...] = h_sc[...]
    cN_ref[...] = c_sc[...]


def bilstm_layer(x_flat, seq_len, batch_pad, wih_s, whh_s, b_s, hidden):
    """x_flat: (T*B_pad, Ein) f32.  wih_s: (D, Ein, 4H) bf16.  whh_s: (D, H, 4H) bf16.
    b_s: (D, 1, 4H) f32.  Returns (out (D, T*B_pad, H), h_N (D,B_pad,H), c_N (D,B_pad,H))."""
    D = wih_s.shape[0]
    Ein = x_flat.shape[1]
    T, B, H = seq_len, batch_pad, hidden

    kernel = functools.partial(_bilstm_layer_kernel,
                               hidden=H, seq_len=T, batch=B)
    out, h_n, c_n = pl.pallas_call(
        kernel,
        out_shape=(jax.ShapeDtypeStruct((D, T * B, H), jnp.float32),
                   jax.ShapeDtypeStruct((D, B, H), jnp.float32),
                   jax.ShapeDtypeStruct((D, B, H), jnp.float32)),
        grid_spec=pltpu.PrefetchScalarGridSpec(
            num_scalar_prefetch=0,
            grid=(D,),
            in_specs=[pl.BlockSpec((T * B, Ein), lambda d: (0, 0)),
                      pl.BlockSpec((None, Ein, 4 * H), lambda d: (d, 0, 0)),
                      pl.BlockSpec((None, H, 4 * H), lambda d: (d, 0, 0)),
                      pl.BlockSpec((None, 1, 4 * H), lambda d: (d, 0, 0))],
            out_specs=(pl.BlockSpec((None, T * B, H), lambda d: (d, 0, 0)),
                       pl.BlockSpec((None, B, H), lambda d: (d, 0, 0)),
                       pl.BlockSpec((None, B, H), lambda d: (d, 0, 0))),
            scratch_shapes=[pltpu.VMEM((T * B, 4 * H), jnp.float32),
                            pltpu.VMEM((B, H), jnp.float32),
                            pltpu.VMEM((B, H), jnp.float32)]),
        compiler_params=pltpu.CompilerParams(
            dimension_semantics=("parallel",)),
    )(x_flat, wih_s, whh_s, b_s)
    return out, h_n, c_n


# --------------------------- EncoderRNN forward ----------------------------- #
def init_encoder_params(key, embedding_dim, hidden_dim, num_layers, bidirectional):
    num_directions = 2 if bidirectional else 1
    bound = 1.0 / (hidden_dim ** 0.5)
    params = []
    for layer in range(num_layers):
        in_size = embedding_dim if layer == 0 else hidden_dim * num_directions
        layer_params = []
        for _ in range(num_directions):
            key, k1, k2, k3, k4 = jax.random.split(key, 5)
            wih = jax.random.uniform(k1, (4 * hidden_dim, in_size), jnp.float32, -bound, bound)
            whh = jax.random.uniform(k2, (4 * hidden_dim, hidden_dim), jnp.float32, -bound, bound)
            b_ih = jax.random.uniform(k3, (4 * hidden_dim,), jnp.float32, -bound, bound)
            b_hh = jax.random.uniform(k4, (4 * hidden_dim,), jnp.float32, -bound, bound)
            layer_params.append((wih, whh, b_ih, b_hh))
        params.append(layer_params)
    return params


def encoder_rnn_forward(params, vec_txt, hidden_dim, bidirectional):
    """Mirrors EncoderRNN.forward: vec_txt (B, T, E) -> (ehs, (h_n, c_n))."""
    B, T, E = vec_txt.shape
    B_pad = ((B + 7) // 8) * 8                       # pad batch to sublane multiple
    H = hidden_dim
    num_dir = 2 if bidirectional else 1

    x_tm = jnp.transpose(vec_txt, (1, 0, 2)).astype(jnp.float32)     # (T, B, E)
    if B_pad != B:
        x_tm = jnp.pad(x_tm, ((0, 0), (0, B_pad - B), (0, 0)))
    x_flat = x_tm.reshape(T * B_pad, E)

    h_states, c_states = [], []
    for layer_params in params:
        D = len(layer_params)
        wih_s = jnp.stack([jnp.transpose(p[0]) for p in layer_params]
                          ).astype(jnp.bfloat16)                      # (D, Ein, 4H)
        whh_s = jnp.stack([jnp.transpose(p[1]) for p in layer_params]
                          ).astype(jnp.bfloat16)                      # (D, H, 4H)
        b_s = jnp.stack([(p[2] + p[3]).reshape(1, 4 * H) for p in layer_params]
                        ).astype(jnp.float32)                         # (D, 1, 4H)

        out, h_n, c_n = bilstm_layer(x_flat, T, B_pad, wih_s, whh_s, b_s, H)
        # Next-layer input: concat of directions along feature (PyTorch layout).
        x_flat = jnp.concatenate([out[dd] for dd in range(D)], axis=-1)
        h_states.append(h_n)
        c_states.append(c_n)
        # TODO(synk): inter-layer dropout omitted (inference-mode semantics).

    ehs = x_flat.reshape(T, B_pad, num_dir * H)
    ehs = jnp.transpose(ehs, (1, 0, 2))[:B]                           # (B, T, D*H)
    h_n = jnp.concatenate(h_states, axis=0)[:, :B, :]                 # (L*D, B, H)
    c_n = jnp.concatenate(c_states, axis=0)[:, :B, :]
    state = (h_n, c_n)
    if bidirectional:
        state = (state[0][0::2] + state[0][1::2], state[1][0::2] + state[1][1::2])
        ehs = ehs[:, :, :H] + ehs[:, :, H:]
    return ehs, state


# --------------------------- pure-JAX reference ----------------------------- #
def _encoder_ref(params, vec_txt, hidden_dim, bidirectional):
    x_tm = jnp.transpose(vec_txt, (1, 0, 2)).astype(jnp.float32)      # (T, B, E)
    Bn = x_tm.shape[1]
    H = hidden_dim
    h_states, c_states = [], []
    for layer_params in params:
        dir_outs = []
        for dd, (wih, whh, b_ih, b_hh) in enumerate(layer_params):
            xin = x_tm[::-1] if dd == 1 else x_tm
            b = b_ih + b_hh

            def step(carry, x_t, wih=wih, whh=whh, b=b):
                h, c = carry
                gates = x_t @ wih.T + h @ whh.T + b
                i, f, g, o = jnp.split(gates, 4, axis=-1)
                c = jax.nn.sigmoid(f) * c + jax.nn.sigmoid(i) * jnp.tanh(g)
                h = jax.nn.sigmoid(o) * jnp.tanh(c)
                return (h, c), h

            init = (jnp.zeros((Bn, H), jnp.float32), jnp.zeros((Bn, H), jnp.float32))
            (h_n, c_n), out = jax.lax.scan(step, init, xin)
            if dd == 1:
                out = out[::-1]
            dir_outs.append(out)
            h_states.append(h_n)
            c_states.append(c_n)
        x_tm = jnp.concatenate(dir_outs, axis=-1)
    ehs = jnp.transpose(x_tm, (1, 0, 2))
    h_n = jnp.stack(h_states)
    c_n = jnp.stack(c_states)
    if bidirectional:
        h_n = h_n[0::2] + h_n[1::2]
        c_n = c_n[0::2] + c_n[1::2]
        ehs = ehs[:, :, :H] + ehs[:, :, H:]
    return ehs, (h_n, c_n)


# ---------------------------------- main ------------------------------------ #
if __name__ == "__main__":
    B, T, E, H, L = 4, 8, 32, 32, 2
    bidirectional = True

    key = jax.random.PRNGKey(0)
    kx, kp = jax.random.split(key)
    vec_txt = jax.random.normal(kx, (B, T, E), jnp.float32)
    params = init_encoder_params(kp, E, H, L, bidirectional)

    ehs, (h_n, c_n) = encoder_rnn_forward(params, vec_txt, H, bidirectional)
    jax.block_until_ready((ehs, h_n, c_n))

    # Sanity check against a pure-JAX f32 lax.scan reference. Tolerance is
    # relaxed because the kernel uses bf16 MXU operands (f32 accumulation).
    ehs_r, (h_r, c_r) = _encoder_ref(params, vec_txt, H, bidirectional)
    assert ehs.shape == (B, T, H) and h_n.shape == (L, B, H) and c_n.shape == (L, B, H)
    err_e = float(jnp.max(jnp.abs(ehs - ehs_r)))
    err_h = float(jnp.max(jnp.abs(h_n - h_r)))
    err_c = float(jnp.max(jnp.abs(c_n - c_r)))
    assert jnp.allclose(ehs, ehs_r, rtol=5e-2, atol=5e-2), err_e
    assert jnp.allclose(h_n, h_r, rtol=5e-2, atol=5e-2), err_h
    assert jnp.allclose(c_n, c_r, rtol=5e-2, atol=5e-2), err_c

    print("KERNEL_OK")
</pallas_src>

<mosaic_0001>
module attributes {stable_mosaic.version = 11 : i64} {
  func.func @_bilstm_layer_kernel(%arg0: i32, %arg1: memref<64x32xf32, #tpu.memory_space<vmem>>, %arg2: memref<1x32x128xbf16, #tpu.memory_space<vmem>>, %arg3: memref<1x32x128xbf16, #tpu.memory_space<vmem>>, %arg4: memref<1x1x128xf32, #tpu.memory_space<vmem>>, %arg5: memref<1x64x32xf32, #tpu.memory_space<vmem>>, %arg6: memref<1x8x32xf32, #tpu.memory_space<vmem>>, %arg7: memref<1x8x32xf32, #tpu.memory_space<vmem>>, %arg8: memref<64x128xf32, #tpu.memory_space<vmem>>, %arg9: memref<8x32xf32, #tpu.memory_space<vmem>>, %arg10: memref<8x32xf32, #tpu.memory_space<vmem>>) attributes {dimension_semantics = [#tpu.dimension_semantics<parallel>], iteration_bounds = array<i64: 2>, scalar_prefetch = 0 : i64, scratch_operands = 3 : i64, tpu.core_type = #tpu.core_type<tc>, window_params = [{pipeline_mode = #tpu.pipeline_mode<synchronous>, transform_indices = @transform_0, window_bounds = array<i64: 64, 32>}, {transform_indices = @transform_1, window_bounds = array<i64: 1, 32, 128>}, {transform_indices = @transform_2, window_bounds = array<i64: 1, 32, 128>}, {transform_indices = @transform_3, window_bounds = array<i64: 1, 1, 128>}, {transform_indices = @transform_4, window_bounds = array<i64: 1, 64, 32>}, {transform_indices = @transform_5, window_bounds = array<i64: 1, 8, 32>}, {transform_indices = @transform_6, window_bounds = array<i64: 1, 8, 32>}]} {
    %c0 = arith.constant 0 : index
    %c0_0 = arith.constant 0 : index
    %0 = vector.load %arg1[%c0, %c0_0] : memref<64x32xf32, #tpu.memory_space<vmem>>, vector<64x32xf32>
    %1 = arith.truncf %0 : vector<64x32xf32> to vector<64x32xbf16>
    %c0_1 = arith.constant 0 : index
    %c0_2 = arith.constant 0 : index
    %c0_3 = arith.constant 0 : index
    %2 = vector.load %arg2[%c0_1, %c0_2, %c0_3] : memref<1x32x128xbf16, #tpu.memory_space<vmem>>, vector<1x32x128xbf16>
    %3 = vector.shape_cast %2 : vector<1x32x128xbf16> to vector<32x128xbf16>
    %cst = arith.constant dense<0.000000e+00> : vector<64x128xf32>
    %4 = tpu.matmul %1, %3, %cst {dimension_numbers = #tpu.dot_dimension_numbers<[1], [0], [0], [1], [0, 0, 1, 1], [], []>} : vector<64x32xbf16>, vector<32x128xbf16>, vector<64x128xf32> -> vector<64x128xf32>
    %c0_4 = arith.constant 0 : index
    %c0_5 = arith.constant 0 : index
    %c0_6 = arith.constant 0 : index
    %5 = vector.load %arg4[%c0_4, %c0_5, %c0_6] : memref<1x1x128xf32, #tpu.memory_space<vmem>>, vector<1x1x128xf32>
    %6 = vector.shape_cast %5 : vector<1x1x128xf32> to vector<1x128xf32>
    %7 = vector.broadcast %6 : vector<1x128xf32> to vector<64x128xf32>
    %8 = arith.addf %4, %7 : vector<64x128xf32>
    %c0_7 = arith.constant 0 : index
    %c0_8 = arith.constant 0 : index
    %9 = vector.load %arg8[%c0_7, %c0_8] : memref<64x128xf32, #tpu.memory_space<vmem>>, vector<64x128xf32>
    tpu.vector_store %arg8[%c0_7, %c0_8], %8 {strides = array<i32>} : memref<64x128xf32, #tpu.memory_space<vmem>>, vector<64x128xf32>,
    %c0_9 = arith.constant 0 : index
    %c0_10 = arith.constant 0 : index
    %c0_11 = arith.constant 0 : index
    %10 = vector.load %arg3[%c0_9, %c0_10, %c0_11] : memref<1x32x128xbf16, #tpu.memory_space<vmem>>, vector<1x32x128xbf16>
    %11 = vector.shape_cast %10 : vector<1x32x128xbf16> to vector<32x128xbf16>
    %cst_12 = arith.constant 0.000000e+00 : f32
    %12 = vector.broadcast %cst_12 : f32 to vector<8x32xf32>
    %c0_13 = arith.constant 0 : index
    %c0_14 = arith.constant 0 : index
    %13 = vector.load %arg9[%c0_13, %c0_14] : memref<8x32xf32, #tpu.memory_space<vmem>>, vector<8x32xf32>
    tpu.vector_store %arg9[%c0_13, %c0_14], %12 {strides = array<i32>} : memref<8x32xf32, #tpu.memory_space<vmem>>, vector<8x32xf32>,
    %cst_15 = arith.constant 0.000000e+00 : f32
    %14 = vector.broadcast %cst_15 : f32 to vector<8x32xf32>
    %c0_16 = arith.constant 0 : index
    %c0_17 = arith.constant 0 : index
    %15 = vector.load %arg10[%c0_16, %c0_17] : memref<8x32xf32, #tpu.memory_space<vmem>>, vector<8x32xf32>
    tpu.vector_store %arg10[%c0_16, %c0_17], %14 {strides = array<i32>} : memref<8x32xf32, #tpu.memory_space<vmem>>, vector<8x32xf32>,
    %c0_i32 = arith.constant 0 : i32
    %c2_i32 = arith.constant 2 : i32
    %16 = arith.muli %c2_i32, %c0_i32 : i32
    %c7_i32 = arith.constant 7 : i32
    %17 = arith.subi %c7_i32, %16 : i32
    %18 = arith.muli %arg0, %17 : i32
    %19 = arith.addi %c0_i32, %18 : i32
    %c8_i32 = arith.constant 8 : i32
    %20 = arith.muli %19, %c8_i32 : i32
    %21 = tpu.assume_multiple %20, 8 : i32
    %c0_18 = arith.constant 0 : index
    %c0_19 = arith.constant 0 : index
    %22 = vector.load %arg9[%c0_18, %c0_19] : memref<8x32xf32, #tpu.memory_space<vmem>>, vector<8x32xf32>
    %23 = arith.index_cast %21 : i32 to index
    %c0_20 = arith.constant 0 : index
    %24 = vector.load %arg8[%23, %c0_20] : memref<64x128xf32, #tpu.memory_space<vmem>>, vector<8x128xf32>
    %25 = arith.truncf %22 : vector<8x32xf32> to vector<8x32xbf16>
    %cst_21 = arith.constant dense<0.000000e+00> : vector<8x128xf32>
    %26 = tpu.matmul %25, %11, %cst_21 {dimension_numbers = #tpu.dot_dimension_numbers<[1], [0], [0], [1], [0, 0, 1, 1], [], []>} : vector<8x32xbf16>, vector<32x128xbf16>, vector<8x128xf32> -> vector<8x128xf32>
    %27 = arith.addf %24, %26 : vector<8x128xf32>
    %28 = vector.extract_strided_slice %27 {offsets = [0, 0], sizes = [8, 32], strides = [1, 1]} : vector<8x128xf32> to vector<8x32xf32>
    %29 = arith.negf %28 : vector<8x32xf32>
    %30 = math.exp %29 : vector<8x32xf32>
    %cst_22 = arith.constant 1.000000e+00 : f32
    %31 = vector.broadcast %cst_22 : f32 to vector<8x32xf32>
    %32 = arith.addf %31, %30 : vector<8x32xf32>
    %33 = arith.divf %31, %32 : vector<8x32xf32>
    %34 = vector.extract_strided_slice %27 {offsets = [0, 32], sizes = [8, 32], strides = [1, 1]} : vector<8x128xf32> to vector<8x32xf32>
    %35 = arith.negf %34 : vector<8x32xf32>
    %36 = math.exp %35 : vector<8x32xf32>
    %cst_23 = arith.constant 1.000000e+00 : f32
    %37 = vector.broadcast %cst_23 : f32 to vector<8x32xf32>
    %38 = arith.addf %37, %36 : vector<8x32xf32>
    %39 = arith.divf %37, %38 : vector<8x32xf32>
    %40 = vector.extract_strided_slice %27 {offsets = [0, 64], sizes = [8, 32], strides = [1, 1]} : vector<8x128xf32> to vector<8x32xf32>
    %41 = math.tanh %40 : vector<8x32xf32>
    %42 = vector.extract_strided_slice %27 {offsets = [0, 96], sizes = [8, 32], strides = [1, 1]} : vector<8x128xf32> to vector<8x32xf32>
    %43 = arith.negf %42 : vector<8x32xf32>
    %44 = math.exp %43 : vector<8x32xf32>
    %cst_24 = arith.constant 1.000000e+00 : f32
    %45 = vector.broadcast %cst_24 : f32 to vector<8x32xf32>
    %46 = arith.addf %45, %44 : vector<8x32xf32>
    %47 = arith.divf %45, %46 : vector<8x32xf32>
    %c0_25 = arith.constant 0 : index
    %c0_26 = arith.constant 0 : index
    %48 = vector.load %arg10[%c0_25, %c0_26] : memref<8x32xf32, #tpu.memory_space<vmem>>, vector<8x32xf32>
    %49 = arith.mulf %39, %48 : vector<8x32xf32>
    %50 = arith.mulf %33, %41 : vector<8x32xf32>
    %51 = arith.addf %49, %50 : vector<8x32xf32>
    %52 = math.tanh %51 : vector<8x32xf32>
    %53 = arith.mulf %47, %52 : vector<8x32xf32>
    %c0_27 = arith.constant 0 : index
    %c0_28 = arith.constant 0 : index
    %54 = vector.load %arg9[%c0_27, %c0_28] : memref<8x32xf32, #tpu.memory_space<vmem>>, vector<8x32xf32>
    tpu.vector_store %arg9[%c0_27, %c0_28], %53 {strides = array<i32>} : memref<8x32xf32, #tpu.memory_space<vmem>>, vector<8x32xf32>,
    %c0_29 = arith.constant 0 : index
    %c0_30 = arith.constant 0 : index
    %55 = vector.load %arg10[%c0_29, %c0_30] : memref<8x32xf32, #tpu.memory_space<vmem>>, vector<8x32xf32>
    tpu.vector_store %arg10[%c0_29, %c0_30], %51 {strides = array<i32>} : memref<8x32xf32, #tpu.memory_space<vmem>>, vector<8x32xf32>,
    %c0_31 = arith.constant 0 : index
    %56 = arith.index_cast %21 : i32 to index
    %c0_32 = arith.constant 0 : index
    %57 = vector.load %arg5[%c0_31, %56, %c0_32] : memref<1x64x32xf32, #tpu.memory_space<vmem>>, vector<1x8x32xf32>
    %58 = vector.shape_cast %57 : vector<1x8x32xf32> to vector<8x32xf32>
    %59 = vector.shape_cast %53 : vector<8x32xf32> to vector<1x8x32xf32>
    tpu.vector_store %arg5[%c0_31, %56, %c0_32], %59 {strides = array<i32>} : memref<1x64x32xf32, #tpu.memory_space<vmem>>, vector<1x8x32xf32>,
    %c1_i32 = arith.constant 1 : i32
    %c2_i32_33 = arith.constant 2 : i32
    %60 = arith.muli %c2_i32_33, %c1_i32 : i32
    %c7_i32_34 = arith.constant 7 : i32
    %61 = arith.subi %c7_i32_34, %60 : i32
    %62 = arith.muli %arg0, %61 : i32
    %63 = arith.addi %c1_i32, %62 : i32
    %c8_i32_35 = arith.constant 8 : i32
    %64 = arith.muli %63, %c8_i32_35 : i32
    %65 = tpu.assume_multiple %64, 8 : i32
    %c0_36 = arith.constant 0 : index
    %c0_37 = arith.constant 0 : index
    %66 = vector.load %arg9[%c0_36, %c0_37] : memref<8x32xf32, #tpu.memory_space<vmem>>, vector<8x32xf32>
    %67 = arith.index_cast %65 : i32 to index
    %c0_38 = arith.constant 0 : index
    %68 = vector.load %arg8[%67, %c0_38] : memref<64x128xf32, #tpu.memory_space<vmem>>, vector<8x128xf32>
    %69 = arith.truncf %66 : vector<8x32xf32> to vector<8x32xbf16>
    %cst_39 = arith.constant dense<0.000000e+00> : vector<8x128xf32>
    %70 = tpu.matmul %69, %11, %cst_39 {dimension_numbers = #tpu.dot_dimension_numbers<[1], [0], [0], [1], [0, 0, 1, 1], [], []>} : vector<8x32xbf16>, vector<32x128xbf16>, vector<8x128xf32> -> vector<8x128xf32>
    %71 = arith.addf %68, %70 : vector<8x128xf32>
    %72 = vector.extract_strided_slice %71 {offsets = [0, 0], sizes = [8, 32], strides = [1, 1]} : vector<8x128xf32> to vector<8x32xf32>
    %73 = arith.negf %72 : vector<8x32xf32>
    %74 = math.exp %73 : vector<8x32xf32>
    %cst_40 = arith.constant 1.000000e+00 : f32
    %75 = vector.broadcast %cst_40 : f32 to vector<8x32xf32>
    %76 = arith.addf %75, %74 : vector<8x32xf32>
    %77 = arith.divf %75, %76 : vector<8x32xf32>
    %78 = vector.extract_strided_slice %71 {offsets = [0, 32], sizes = [8, 32], strides = [1, 1]} : vector<8x128xf32> to vector<8x32xf32>
    %79 = arith.negf %78 : vector<8x32xf32>
    %80 = math.exp %79 : vector<8x32xf32>
    %cst_41 = arith.constant 1.000000e+00 : f32
    %81 = vector.broadcast %cst_41 : f32 to vector<8x32xf32>
    %82 = arith.addf %81, %80 : vector<8x32xf32>
    %83 = arith.divf %81, %82 : vector<8x32xf32>
    %84 = vector.extract_strided_slice %71 {offsets = [0, 64], sizes = [8, 32], strides = [1, 1]} : vector<8x128xf32> to vector<8x32xf32>
    %85 = math.tanh %84 : vector<8x32xf32>
    %86 = vector.extract_strided_slice %71 {offsets = [0, 96], sizes = [8, 32], strides = [1, 1]} : vector<8x128xf32> to vector<8x32xf32>
    %87 = arith.negf %86 : vector<8x32xf32>
    %88 = math.exp %87 : vector<8x32xf32>
    %cst_42 = arith.constant 1.000000e+00 : f32
    %89 = vector.broadcast %cst_42 : f32 to vector<8x32xf32>
    %90 = arith.addf %89, %88 : vector<8x32xf32>
    %91 = arith.divf %89, %90 : vector<8x32xf32>
    %c0_43 = arith.constant 0 : index
    %c0_44 = arith.constant 0 : index
    %92 = vector.load %arg10[%c0_43, %c0_44] : memref<8x32xf32, #tpu.memory_space<vmem>>, vector<8x32xf32>
    %93 = arith.mulf %83, %92 : vector<8x32xf32>
    %94 = arith.mulf %77, %85 : vector<8x32xf32>
    %95 = arith.addf %93, %94 : vector<8x32xf32>
    %96 = math.tanh %95 : vector<8x32xf32>
    %97 = arith.mulf %91, %96 : vector<8x32xf32>
    %c0_45 = arith.constant 0 : index
    %c0_46 = arith.constant 0 : index
    %98 = vector.load %arg9[%c0_45, %c0_46] : memref<8x32xf32, #tpu.memory_space<vmem>>, vector<8x32xf32>
    tpu.vector_store %arg9[%c0_45, %c0_46], %97 {strides = array<i32>} : memref<8x32xf32, #tpu.memory_space<vmem>>, vector<8x32xf32>,
    %c0_47 = arith.constant 0 : index
    %c0_48 = arith.constant 0 : index
    %99 = vector.load %arg10[%c0_47, %c0_48] : memref<8x32xf32, #tpu.memory_space<vmem>>, vector<8x32xf32>
    tpu.vector_store %arg10[%c0_47, %c0_48], %95 {strides = array<i32>} : memref<8x32xf32, #tpu.memory_space<vmem>>, vector<8x32xf32>,
    %c0_49 = arith.constant 0 : index
    %100 = arith.index_cast %65 : i32 to index
    %c0_50 = arith.constant 0 : index
    %101 = vector.load %arg5[%c0_49, %100, %c0_50] : memref<1x64x32xf32, #tpu.memory_space<vmem>>, vector<1x8x32xf32>
    %102 = vector.shape_cast %101 : vector<1x8x32xf32> to vector<8x32xf32>
    %103 = vector.shape_cast %97 : vector<8x32xf32> to vector<1x8x32xf32>
    tpu.vector_store %arg5[%c0_49, %100, %c0_50], %103 {strides = array<i32>} : memref<1x64x32xf32, #tpu.memory_space<vmem>>, vector<1x8x32xf32>,
    %c2_i32_51 = arith.constant 2 : i32
    %c2_i32_52 = arith.constant 2 : i32
    %104 = arith.muli %c2_i32_52, %c2_i32_51 : i32
    %c7_i32_53 = arith.constant 7 : i32
    %105 = arith.subi %c7_i32_53, %104 : i32
    %106 = arith.muli %arg0, %105 : i32
    %107 = arith.addi %c2_i32_51, %106 : i32
    %c8_i32_54 = arith.constant 8 : i32
    %108 = arith.muli %107, %c8_i32_54 : i32
    %109 = tpu.assume_multiple %108, 8 : i32
    %c0_55 = arith.constant 0 : index
    %c0_56 = arith.constant 0 : index
    %110 = vector.load %arg9[%c0_55, %c0_56] : memref<8x32xf32, #tpu.memory_space<vmem>>, vector<8x32xf32>
    %111 = arith.index_cast %109 : i32 to index
    %c0_57 = arith.constant 0 : index
    %112 = vector.load %arg8[%111, %c0_57] : memref<64x128xf32, #tpu.memory_space<vmem>>, vector<8x128xf32>
    %113 = arith.truncf %110 : vector<8x32xf32> to vector<8x32xbf16>
    %cst_58 = arith.constant dense<0.000000e+00> : vector<8x128xf32>
    %114 = tpu.matmul %113, %11, %cst_58 {dimension_numbers = #tpu.dot_dimension_numbers<[1], [0], [0], [1], [0, 0, 1, 1], [], []>} : vector<8x32xbf16>, vector<32x128xbf16>, vector<8x128xf32> -> vector<8x128xf32>
    %115 = arith.addf %112, %114 : vector<8x128xf32>
    %116 = vector.extract_strided_slice %115 {offsets = [0, 0], sizes = [8, 32], strides = [1, 1]} : vector<8x128xf32> to vector<8x32xf32>
    %117 = arith.negf %116 : vector<8x32xf32>
    %118 = math.exp %117 : vector<8x32xf32>
    %cst_59 = arith.constant 1.000000e+00 : f32
    %119 = vector.broadcast %cst_59 : f32 to vector<8x32xf32>
    %120 = arith.addf %119, %118 : vector<8x32xf32>
    %121 = arith.divf %119, %120 : vector<8x32xf32>
    %122 = vector.extract_strided_slice %115 {offsets = [0, 32], sizes = [8, 32], strides = [1, 1]} : vector<8x128xf32> to vector<8x32xf32>
    %123 = arith.negf %122 : vector<8x32xf32>
    %124 = math.exp %123 : vector<8x32xf32>
    %cst_60 = arith.constant 1.000000e+00 : f32
    %125 = vector.broadcast %cst_60 : f32 to vector<8x32xf32>
    %126 = arith.addf %125, %124 : vector<8x32xf32>
    %127 = arith.divf %125, %126 : vector<8x32xf32>
    %128 = vector.extract_strided_slice %115 {offsets = [0, 64], sizes = [8, 32], strides = [1, 1]} : vector<8x128xf32> to vector<8x32xf32>
    %129 = math.tanh %128 : vector<8x32xf32>
    %130 = vector.extract_strided_slice %115 {offsets = [0, 96], sizes = [8, 32], strides = [1, 1]} : vector<8x128xf32> to vector<8x32xf32>
    %131 = arith.negf %130 : vector<8x32xf32>
    %132 = math.exp %131 : vector<8x32xf32>
    %cst_61 = arith.constant 1.000000e+00 : f32
    %133 = vector.broadcast %cst_61 : f32 to vector<8x32xf32>
    %134 = arith.addf %133, %132 : vector<8x32xf32>
    %135 = arith.divf %133, %134 : vector<8x32xf32>
    %c0_62 = arith.constant 0 : index
    %c0_63 = arith.constant 0 : index
    %136 = vector.load %arg10[%c0_62, %c0_63] : memref<8x32xf32, #tpu.memory_space<vmem>>, vector<8x32xf32>
    %137 = arith.mulf %127, %136 : vector<8x32xf32>
    %138 = arith.mulf %121, %129 : vector<8x32xf32>
    %139 = arith.addf %137, %138 : vector<8x32xf32>
    %140 = math.tanh %139 : vector<8x32xf32>
    %141 = arith.mulf %135, %140 : vector<8x32xf32>
    %c0_64 = arith.constant 0 : index
    %c0_65 = arith.constant 0 : index
    %142 = vector.load %arg9[%c0_64, %c0_65] : memref<8x32xf32, #tpu.memory_space<vmem>>, vector<8x32xf32>
    tpu.vector_store %arg9[%c0_64, %c0_65], %141 {strides = array<i32>} : memref<8x32xf32, #tpu.memory_space<vmem>>, vector<8x32xf32>,
    %c0_66 = arith.constant 0 : index
    %c0_67 = arith.constant 0 : index
    %143 = vector.load %arg10[%c0_66, %c0_67] : memref<8x32xf32, #tpu.memory_space<vmem>>, vector<8x32xf32>
    tpu.vector_store %arg10[%c0_66, %c0_67], %139 {strides = array<i32>} : memref<8x32xf32, #tpu.memory_space<vmem>>, vector<8x32xf32>,
    %c0_68 = arith.constant 0 : index
    %144 = arith.index_cast %109 : i32 to index
    %c0_69 = arith.constant 0 : index
    %145 = vector.load %arg5[%c0_68, %144, %c0_69] : memref<1x64x32xf32, #tpu.memory_space<vmem>>, vector<1x8x32xf32>
    %146 = vector.shape_cast %145 : vector<1x8x32xf32> to vector<8x32xf32>
    %147 = vector.shape_cast %141 : vector<8x32xf32> to vector<1x8x32xf32>
    tpu.vector_store %arg5[%c0_68, %144, %c0_69], %147 {strides = array<i32>} : memref<1x64x32xf32, #tpu.memory_space<vmem>>, vector<1x8x32xf32>,
    %c3_i32 = arith.constant 3 : i32
    %c2_i32_70 = arith.constant 2 : i32
    %148 = arith.muli %c2_i32_70, %c3_i32 : i32
    %c7_i32_71 = arith.constant 7 : i32
    %149 = arith.subi %c7_i32_71, %148 : i32
    %150 = arith.muli %arg0, %149 : i32
    %151 = arith.addi %c3_i32, %150 : i32
    %c8_i32_72 = arith.constant 8 : i32
    %152 = arith.muli %151, %c8_i32_72 : i32
    %153 = tpu.assume_multiple %152, 8 : i32
    %c0_73 = arith.constant 0 : index
    %c0_74 = arith.constant 0 : index
    %154 = vector.load %arg9[%c0_73, %c0_74] : memref<8x32xf32, #tpu.memory_space<vmem>>, vector<8x32xf32>
    %155 = arith.index_cast %153 : i32 to index
    %c0_75 = arith.constant 0 : index
    %156 = vector.load %arg8[%155, %c0_75] : memref<64x128xf32, #tpu.memory_space<vmem>>, vector<8x128xf32>
    %157 = arith.truncf %154 : vector<8x32xf32> to vector<8x32xbf16>
    %cst_76 = arith.constant dense<0.000000e+00> : vector<8x128xf32>
    %158 = tpu.matmul %157, %11, %cst_76 {dimension_numbers = #tpu.dot_dimension_numbers<[1], [0], [0], [1], [0, 0, 1, 1], [], []>} : vector<8x32xbf16>, vector<32x128xbf16>, vector<8x128xf32> -> vector<8x128xf32>
    %159 = arith.addf %156, %158 : vector<8x128xf32>
    %160 = vector.extract_strided_slice %159 {offsets = [0, 0], sizes = [8, 32], strides = [1, 1]} : vector<8x128xf32> to vector<8x32xf32>
    %161 = arith.negf %160 : vector<8x32xf32>
    %162 = math.exp %161 : vector<8x32xf32>
    %cst_77 = arith.constant 1.000000e+00 : f32
    %163 = vector.broadcast %cst_77 : f32 to vector<8x32xf32>
    %164 = arith.addf %163, %162 : vector<8x32xf32>
    %165 = arith.divf %163, %164 : vector<8x32xf32>
    %166 = vector.extract_strided_slice %159 {offsets = [0, 32], sizes = [8, 32], strides = [1, 1]} : vector<8x128xf32> to vector<8x32xf32>
    %167 = arith.negf %166 : vector<8x32xf32>
    %168 = math.exp %167 : vector<8x32xf32>
    %cst_78 = arith.constant 1.000000e+00 : f32
    %169 = vector.broadcast %cst_78 : f32 to vector<8x32xf32>
    %170 = arith.addf %169, %168 : vector<8x32xf32>
    %171 = arith.divf %169, %170 : vector<8x32xf32>
    %172 = vector.extract_strided_slice %159 {offsets = [0, 64], sizes = [8, 32], strides = [1, 1]} : vector<8x128xf32> to vector<8x32xf32>
    %173 = math.tanh %172 : vector<8x32xf32>
    %174 = vector.extract_strided_slice %159 {offsets = [0, 96], sizes = [8, 32], strides = [1, 1]} : vector<8x128xf32> to vector<8x32xf32>
    %175 = arith.negf %174 : vector<8x32xf32>
    %176 = math.exp %175 : vector<8x32xf32>
    %cst_79 = arith.constant 1.000000e+00 : f32
    %177 = vector.broadcast %cst_79 : f32 to vector<8x32xf32>
    %178 = arith.addf %177, %176 : vector<8x32xf32>
    %179 = arith.divf %177, %178 : vector<8x32xf32>
    %c0_80 = arith.constant 0 : index
    %c0_81 = arith.constant 0 : index
    %180 = vector.load %arg10[%c0_80, %c0_81] : memref<8x32xf32, #tpu.memory_space<vmem>>, vector<8x32xf32>
    %181 = arith.mulf %171, %180 : vector<8x32xf32>
    %182 = arith.mulf %165, %173 : vector<8x32xf32>
    %183 = arith.addf %181, %182 : vector<8x32xf32>
    %184 = math.tanh %183 : vector<8x32xf32>
    %185 = arith.mulf %179, %184 : vector<8x32xf32>
    %c0_82 = arith.constant 0 : index
    %c0_83 = arith.constant 0 : index
    %186 = vector.load %arg9[%c0_82, %c0_83] : memref<8x32xf32, #tpu.memory_space<vmem>>, vector<8x32xf32>
    tpu.vector_store %arg9[%c0_82, %c0_83], %185 {strides = array<i32>} : memref<8x32xf32, #tpu.memory_space<vmem>>, vector<8x32xf32>,
    %c0_84 = arith.constant 0 : index
    %c0_85 = arith.constant 0 : index
    %187 = vector.load %arg10[%c0_84, %c0_85] : memref<8x32xf32, #tpu.memory_space<vmem>>, vector<8x32xf32>
    tpu.vector_store %arg10[%c0_84, %c0_85], %183 {strides = array<i32>} : memref<8x32xf32, #tpu.memory_space<vmem>>, vector<8x32xf32>,
    %c0_86 = arith.constant 0 : index
    %188 = arith.index_cast %153 : i32 to index
    %c0_87 = arith.constant 0 : index
    %189 = vector.load %arg5[%c0_86, %188, %c0_87] : memref<1x64x32xf32, #tpu.memory_space<vmem>>, vector<1x8x32xf32>
    %190 = vector.shape_cast %189 : vector<1x8x32xf32> to vector<8x32xf32>
    %191 = vector.shape_cast %185 : vector<8x32xf32> to vector<1x8x32xf32>
    tpu.vector_store %arg5[%c0_86, %188, %c0_87], %191 {strides = array<i32>} : memref<1x64x32xf32, #tpu.memory_space<vmem>>, vector<1x8x32xf32>,
    %c4_i32 = arith.constant 4 : i32
    %c2_i32_88 = arith.constant 2 : i32
    %192 = arith.muli %c2_i32_88, %c4_i32 : i32
    %c7_i32_89 = arith.constant 7 : i32
    %193 = arith.subi %c7_i32_89, %192 : i32
    %194 = arith.muli %arg0, %193 : i32
    %195 = arith.addi %c4_i32, %194 : i32
    %c8_i32_90 = arith.constant 8 : i32
    %196 = arith.muli %195, %c8_i32_90 : i32
    %197 = tpu.assume_multiple %196, 8 : i32
    %c0_91 = arith.constant 0 : index
    %c0_92 = arith.constant 0 : index
    %198 = vector.load %arg9[%c0_91, %c0_92] : memref<8x32xf32, #tpu.memory_space<vmem>>, vector<8x32xf32>
    %199 = arith.index_cast %197 : i32 to index
    %c0_93 = arith.constant 0 : index
    %200 = vector.load %arg8[%199, %c0_93] : memref<64x128xf32, #tpu.memory_space<vmem>>, vector<8x128xf32>
    %201 = arith.truncf %198 : vector<8x32xf32> to vector<8x32xbf16>
    %cst_94 = arith.constant dense<0.000000e+00> : vector<8x128xf32>
    %202 = tpu.matmul %201, %11, %cst_94 {dimension_numbers = #tpu.dot_dimension_numbers<[1], [0], [0], [1], [0, 0, 1, 1], [], []>} : vector<8x32xbf16>, vector<32x128xbf16>, vector<8x128xf32> -> vector<8x128xf32>
    %203 = arith.addf %200, %202 : vector<8x128xf32>
    %204 = vector.extract_strided_slice %203 {offsets = [0, 0], sizes = [8, 32], strides = [1, 1]} : vector<8x128xf32> to vector<8x32xf32>
    %205 = arith.negf %204 : vector<8x32xf32>
    %206 = math.exp %205 : vector<8x32xf32>
    %cst_95 = arith.constant 1.000000e+00 : f32
    %207 = vector.broadcast %cst_95 : f32 to vector<8x32xf32>
    %208 = arith.addf %207, %206 : vector<8x32xf32>
    %209 = arith.divf %207, %208 : vector<8x32xf32>
    %210 = vector.extract_strided_slice %203 {offsets = [0, 32], sizes = [8, 32], strides = [1, 1]} : vector<8x128xf32> to vector<8x32xf32>
    %211 = arith.negf %210 : vector<8x32xf32>
    %212 = math.exp %211 : vector<8x32xf32>
    %cst_96 = arith.constant 1.000000e+00 : f32
    %213 = vector.broadcast %cst_96 : f32 to vector<8x32xf32>
    %214 = arith.addf %213, %212 : vector<8x32xf32>
    %215 = arith.divf %213, %214 : vector<8x32xf32>
    %216 = vector.extract_strided_slice %203 {offsets = [0, 64], sizes = [8, 32], strides = [1, 1]} : vector<8x128xf32> to vector<8x32xf32>
    %217 = math.tanh %216 : vector<8x32xf32>
    %218 = vector.extract_strided_slice %203 {offsets = [0, 96], sizes = [8, 32], strides = [1, 1]} : vector<8x128xf32> to vector<8x32xf32>
    %219 = arith.negf %218 : vector<8x32xf32>
    %220 = math.exp %219 : vector<8x32xf32>
    %cst_97 = arith.constant 1.000000e+00 : f32
    %221 = vector.broadcast %cst_97 : f32 to vector<8x32xf32>
    %222 = arith.addf %221, %220 : vector<8x32xf32>
    %223 = arith.divf %221, %222 : vector<8x32xf32>
    %c0_98 = arith.constant 0 : index
    %c0_99 = arith.constant 0 : index
    %224 = vector.load %arg10[%c0_98, %c0_99] : memref<8x32xf32, #tpu.memory_space<vmem>>, vector<8x32xf32>
    %225 = arith.mulf %215, %224 : vector<8x32xf32>
    %226 = arith.mulf %209, %217 : vector<8x32xf32>
    %227 = arith.addf %225, %226 : vector<8x32xf32>
    %228 = math.tanh %227 : vector<8x32xf32>
    %229 = arith.mulf %223, %228 : vector<8x32xf32>
    %c0_100 = arith.constant 0 : index
    %c0_101 = arith.constant 0 : index
    %230 = vector.load %arg9[%c0_100, %c0_101] : memref<8x32xf32, #tpu.memory_space<vmem>>, vector<8x32xf32>
    tpu.vector_store %arg9[%c0_100, %c0_101], %229 {strides = array<i32>} : memref<8x32xf32, #tpu.memory_space<vmem>>, vector<8x32xf32>,
    %c0_102 = arith.constant 0 : index
    %c0_103 = arith.constant 0 : index
    %231 = vector.load %arg10[%c0_102, %c0_103] : memref<8x32xf32, #tpu.memory_space<vmem>>, vector<8x32xf32>
    tpu.vector_store %arg10[%c0_102, %c0_103], %227 {strides = array<i32>} : memref<8x32xf32, #tpu.memory_space<vmem>>, vector<8x32xf32>,
    %c0_104 = arith.constant 0 : index
    %232 = arith.index_cast %197 : i32 to index
    %c0_105 = arith.constant 0 : index
    %233 = vector.load %arg5[%c0_104, %232, %c0_105] : memref<1x64x32xf32, #tpu.memory_space<vmem>>, vector<1x8x32xf32>
    %234 = vector.shape_cast %233 : vector<1x8x32xf32> to vector<8x32xf32>
    %235 = vector.shape_cast %229 : vector<8x32xf32> to vector<1x8x32xf32>
    tpu.vector_store %arg5[%c0_104, %232, %c0_105], %235 {strides = array<i32>} : memref<1x64x32xf32, #tpu.memory_space<vmem>>, vector<1x8x32xf32>,
    %c5_i32 = arith.constant 5 : i32
    %c2_i32_106 = arith.constant 2 : i32
    %236 = arith.muli %c2_i32_106, %c5_i32 : i32
    %c7_i32_107 = arith.constant 7 : i32
    %237 = arith.subi %c7_i32_107, %236 : i32
    %238 = arith.muli %arg0, %237 : i32
    %239 = arith.addi %c5_i32, %238 : i32
    %c8_i32_108 = arith.constant 8 : i32
    %240 = arith.muli %239, %c8_i32_108 : i32
    %241 = tpu.assume_multiple %240, 8 : i32
    %c0_109 = arith.constant 0 : index
    %c0_110 = arith.constant 0 : index
    %242 = vector.load %arg9[%c0_109, %c0_110] : memref<8x32xf32, #tpu.memory_space<vmem>>, vector<8x32xf32>
    %243 = arith.index_cast %241 : i32 to index
    %c0_111 = arith.constant 0 : index
    %244 = vector.load %arg8[%243, %c0_111] : memref<64x128xf32, #tpu.memory_space<vmem>>, vector<8x128xf32>
    %245 = arith.truncf %242 : vector<8x32xf32> to vector<8x32xbf16>
    %cst_112 = arith.constant dense<0.000000e+00> : vector<8x128xf32>
    %246 = tpu.matmul %245, %11, %cst_112 {dimension_numbers = #tpu.dot_dimension_numbers<[1], [0], [0], [1], [0, 0, 1, 1], [], []>} : vector<8x32xbf16>, vector<32x128xbf16>, vector<8x128xf32> -> vector<8x128xf32>
    %247 = arith.addf %244, %246 : vector<8x128xf32>
    %248 = vector.extract_strided_slice %247 {offsets = [0, 0], sizes = [8, 32], strides = [1, 1]} : vector<8x128xf32> to vector<8x32xf32>
    %249 = arith.negf %248 : vector<8x32xf32>
    %250 = math.exp %249 : vector<8x32xf32>
    %cst_113 = arith.constant 1.000000e+00 : f32
    %251 = vector.broadcast %cst_113 : f32 to vector<8x32xf32>
    %252 = arith.addf %251, %250 : vector<8x32xf32>
    %253 = arith.divf %251, %252 : vector<8x32xf32>
    %254 = vector.extract_strided_slice %247 {offsets = [0, 32], sizes = [8, 32], strides = [1, 1]} : vector<8x128xf32> to vector<8x32xf32>
    %255 = arith.negf %254 : vector<8x32xf32>
    %256 = math.exp %255 : vector<8x32xf32>
    %cst_114 = arith.constant 1.000000e+00 : f32
    %257 = vector.broadcast %cst_114 : f32 to vector<8x32xf32>
    %258 = arith.addf %257, %256 : vector<8x32xf32>
    %259 = arith.divf %257, %258 : vector<8x32xf32>
    %260 = vector.extract_strided_slice %247 {offsets = [0, 64], sizes = [8, 32], strides = [1, 1]} : vector<8x128xf32> to vector<8x32xf32>
    %261 = math.tanh %260 : vector<8x32xf32>
    %262 = vector.extract_strided_slice %247 {offsets = [0, 96], sizes = [8, 32], strides = [1, 1]} : vector<8x128xf32> to vector<8x32xf32>
    %263 = arith.negf %262 : vector<8x32xf32>
    %264 = math.exp %263 : vector<8x32xf32>
    %cst_115 = arith.constant 1.000000e+00 : f32
    %265 = vector.broadcast %cst_115 : f32 to vector<8x32xf32>
    %266 = arith.addf %265, %264 : vector<8x32xf32>
    %267 = arith.divf %265, %266 : vector<8x32xf32>
    %c0_116 = arith.constant 0 : index
    %c0_117 = arith.constant 0 : index
    %268 = vector.load %arg10[%c0_116, %c0_117] : memref<8x32xf32, #tpu.memory_space<vmem>>, vector<8x32xf32>
    %269 = arith.mulf %259, %268 : vector<8x32xf32>
    %270 = arith.mulf %253, %261 : vector<8x32xf32>
    %271 = arith.addf %269, %270 : vector<8x32xf32>
    %272 = math.tanh %271 : vector<8x32xf32>
    %273 = arith.mulf %267, %272 : vector<8x32xf32>
    %c0_118 = arith.constant 0 : index
    %c0_119 = arith.constant 0 : index
    %274 = vector.load %arg9[%c0_118, %c0_119] : memref<8x32xf32, #tpu.memory_space<vmem>>, vector<8x32xf32>
    tpu.vector_store %arg9[%c0_118, %c0_119], %273 {strides = array<i32>} : memref<8x32xf32, #tpu.memory_space<vmem>>, vector<8x32xf32>,
    %c0_120 = arith.constant 0 : index
    %c0_121 = arith.constant 0 : index
    %275 = vector.load %arg10[%c0_120, %c0_121] : memref<8x32xf32, #tpu.memory_space<vmem>>, vector<8x32xf32>
    tpu.vector_store %arg10[%c0_120, %c0_121], %271 {strides = array<i32>} : memref<8x32xf32, #tpu.memory_space<vmem>>, vector<8x32xf32>,
    %c0_122 = arith.constant 0 : index
    %276 = arith.index_cast %241 : i32 to index
    %c0_123 = arith.constant 0 : index
    %277 = vector.load %arg5[%c0_122, %276, %c0_123] : memref<1x64x32xf32, #tpu.memory_space<vmem>>, vector<1x8x32xf32>
    %278 = vector.shape_cast %277 : vector<1x8x32xf32> to vector<8x32xf32>
    %279 = vector.shape_cast %273 : vector<8x32xf32> to vector<1x8x32xf32>
    tpu.vector_store %arg5[%c0_122, %276, %c0_123], %279 {strides = array<i32>} : memref<1x64x32xf32, #tpu.memory_space<vmem>>, vector<1x8x32xf32>,
    %c6_i32 = arith.constant 6 : i32
    %c2_i32_124 = arith.constant 2 : i32
    %280 = arith.muli %c2_i32_124, %c6_i32 : i32
    %c7_i32_125 = arith.constant 7 : i32
    %281 = arith.subi %c7_i32_125, %280 : i32
    %282 = arith.muli %arg0, %281 : i32
    %283 = arith.addi %c6_i32, %282 : i32
    %c8_i32_126 = arith.constant 8 : i32
    %284 = arith.muli %283, %c8_i32_126 : i32
    %285 = tpu.assume_multiple %284, 8 : i32
    %c0_127 = arith.constant 0 : index
    %c0_128 = arith.constant 0 : index
    %286 = vector.load %arg9[%c0_127, %c0_128] : memref<8x32xf32, #tpu.memory_space<vmem>>, vector<8x32xf32>
    %287 = arith.index_cast %285 : i32 to index
    %c0_129 = arith.constant 0 : index
    %288 = vector.load %arg8[%287, %c0_129] : memref<64x128xf32, #tpu.memory_space<vmem>>, vector<8x128xf32>
    %289 = arith.truncf %286 : vector<8x32xf32> to vector<8x32xbf16>
    %cst_130 = arith.constant dense<0.000000e+00> : vector<8x128xf32>
    %290 = tpu.matmul %289, %11, %cst_130 {dimension_numbers = #tpu.dot_dimension_numbers<[1], [0], [0], [1], [0, 0, 1, 1], [], []>} : vector<8x32xbf16>, vector<32x128xbf16>, vector<8x128xf32> -> vector<8x128xf32>
    %291 = arith.addf %288, %290 : vector<8x128xf32>
    %292 = vector.extract_strided_slice %291 {offsets = [0, 0], sizes = [8, 32], strides = [1, 1]} : vector<8x128xf32> to vector<8x32xf32>
    %293 = arith.negf %292 : vector<8x32xf32>
    %294 = math.exp %293 : vector<8x32xf32>
    %cst_131 = arith.constant 1.000000e+00 : f32
    %295 = vector.broadcast %cst_131 : f32 to vector<8x32xf32>
    %296 = arith.addf %295, %294 : vector<8x32xf32>
    %297 = arith.divf %295, %296 : vector<8x32xf32>
    %298 = vector.extract_strided_slice %291 {offsets = [0, 32], sizes = [8, 32], strides = [1, 1]} : vector<8x128xf32> to vector<8x32xf32>
    %299 = arith.negf %298 : vector<8x32xf32>
    %300 = math.exp %299 : vector<8x32xf32>
    %cst_132 = arith.constant 1.000000e+00 : f32
    %301 = vector.broadcast %cst_132 : f32 to vector<8x32xf32>
    %302 = arith.addf %301, %300 : vector<8x32xf32>
    %303 = arith.divf %301, %302 : vector<8x32xf32>
    %304 = vector.extract_strided_slice %291 {offsets = [0, 64], sizes = [8, 32], strides = [1, 1]} : vector<8x128xf32> to vector<8x32xf32>
    %305 = math.tanh %304 : vector<8x32xf32>
    %306 = vector.extract_strided_slice %291 {offsets = [0, 96], sizes = [8, 32], strides = [1, 1]} : vector<8x128xf32> to vector<8x32xf32>
    %307 = arith.negf %306 : vector<8x32xf32>
    %308 = math.exp %307 : vector<8x32xf32>
    %cst_133 = arith.constant 1.000000e+00 : f32
    %309 = vector.broadcast %cst_133 : f32 to vector<8x32xf32>
    %310 = arith.addf %309, %308 : vector<8x32xf32>
    %311 = arith.divf %309, %310 : vector<8x32xf32>
    %c0_134 = arith.constant 0 : index
    %c0_135 = arith.constant 0 : index
    %312 = vector.load %arg10[%c0_134, %c0_135] : memref<8x32xf32, #tpu.memory_space<vmem>>, vector<8x32xf32>
    %313 = arith.mulf %303, %312 : vector<8x32xf32>
    %314 = arith.mulf %297, %305 : vector<8x32xf32>
    %315 = arith.addf %313, %314 : vector<8x32xf32>
    %316 = math.tanh %315 : vector<8x32xf32>
    %317 = arith.mulf %311, %316 : vector<8x32xf32>
    %c0_136 = arith.constant 0 : index
    %c0_137 = arith.constant 0 : index
    %318 = vector.load %arg9[%c0_136, %c0_137] : memref<8x32xf32, #tpu.memory_space<vmem>>, vector<8x32xf32>
    tpu.vector_store %arg9[%c0_136, %c0_137], %317 {strides = array<i32>} : memref<8x32xf32, #tpu.memory_space<vmem>>, vector<8x32xf32>,
    %c0_138 = arith.constant 0 : index
    %c0_139 = arith.constant 0 : index
    %319 = vector.load %arg10[%c0_138, %c0_139] : memref<8x32xf32, #tpu.memory_space<vmem>>, vector<8x32xf32>
    tpu.vector_store %arg10[%c0_138, %c0_139], %315 {strides = array<i32>} : memref<8x32xf32, #tpu.memory_space<vmem>>, vector<8x32xf32>,
    %c0_140 = arith.constant 0 : index
    %320 = arith.index_cast %285 : i32 to index
    %c0_141 = arith.constant 0 : index
    %321 = vector.load %arg5[%c0_140, %320, %c0_141] : memref<1x64x32xf32, #tpu.memory_space<vmem>>, vector<1x8x32xf32>
    %322 = vector.shape_cast %321 : vector<1x8x32xf32> to vector<8x32xf32>
    %323 = vector.shape_cast %317 : vector<8x32xf32> to vector<1x8x32xf32>
    tpu.vector_store %arg5[%c0_140, %320, %c0_141], %323 {strides = array<i32>} : memref<1x64x32xf32, #tpu.memory_space<vmem>>, vector<1x8x32xf32>,
    %c7_i32_142 = arith.constant 7 : i32
    %c2_i32_143 = arith.constant 2 : i32
    %324 = arith.muli %c2_i32_143, %c7_i32_142 : i32
    %c7_i32_144 = arith.constant 7 : i32
    %325 = arith.subi %c7_i32_144, %324 : i32
    %326 = arith.muli %arg0, %325 : i32
    %327 = arith.addi %c7_i32_142, %326 : i32
    %c8_i32_145 = arith.constant 8 : i32
    %328 = arith.muli %327, %c8_i32_145 : i32
    %329 = tpu.assume_multiple %328, 8 : i32
    %c0_146 = arith.constant 0 : index
    %c0_147 = arith.constant 0 : index
    %330 = vector.load %arg9[%c0_146, %c0_147] : memref<8x32xf32, #tpu.memory_space<vmem>>, vector<8x32xf32>
    %331 = arith.index_cast %329 : i32 to index
    %c0_148 = arith.constant 0 : index
    %332 = vector.load %arg8[%331, %c0_148] : memref<64x128xf32, #tpu.memory_space<vmem>>, vector<8x128xf32>
    %333 = arith.truncf %330 : vector<8x32xf32> to vector<8x32xbf16>
    %cst_149 = arith.constant dense<0.000000e+00> : vector<8x128xf32>
    %334 = tpu.matmul %333, %11, %cst_149 {dimension_numbers = #tpu.dot_dimension_numbers<[1], [0], [0], [1], [0, 0, 1, 1], [], []>} : vector<8x32xbf16>, vector<32x128xbf16>, vector<8x128xf32> -> vector<8x128xf32>
    %335 = arith.addf %332, %334 : vector<8x128xf32>
    %336 = vector.extract_strided_slice %335 {offsets = [0, 0], sizes = [8, 32], strides = [1, 1]} : vector<8x128xf32> to vector<8x32xf32>
    %337 = arith.negf %336 : vector<8x32xf32>
    %338 = math.exp %337 : vector<8x32xf32>
    %cst_150 = arith.constant 1.000000e+00 : f32
    %339 = vector.broadcast %cst_150 : f32 to vector<8x32xf32>
    %340 = arith.addf %339, %338 : vector<8x32xf32>
    %341 = arith.divf %339, %340 : vector<8x32xf32>
    %342 = vector.extract_strided_slice %335 {offsets = [0, 32], sizes = [8, 32], strides = [1, 1]} : vector<8x128xf32> to vector<8x32xf32>
    %343 = arith.negf %342 : vector<8x32xf32>
    %344 = math.exp %343 : vector<8x32xf32>
    %cst_151 = arith.constant 1.000000e+00 : f32
    %345 = vector.broadcast %cst_151 : f32 to vector<8x32xf32>
    %346 = arith.addf %345, %344 : vector<8x32xf32>
    %347 = arith.divf %345, %346 : vector<8x32xf32>
    %348 = vector.extract_strided_slice %335 {offsets = [0, 64], sizes = [8, 32], strides = [1, 1]} : vector<8x128xf32> to vector<8x32xf32>
    %349 = math.tanh %348 : vector<8x32xf32>
    %350 = vector.extract_strided_slice %335 {offsets = [0, 96], sizes = [8, 32], strides = [1, 1]} : vector<8x128xf32> to vector<8x32xf32>
    %351 = arith.negf %350 : vector<8x32xf32>
    %352 = math.exp %351 : vector<8x32xf32>
    %cst_152 = arith.constant 1.000000e+00 : f32
    %353 = vector.broadcast %cst_152 : f32 to vector<8x32xf32>
    %354 = arith.addf %353, %352 : vector<8x32xf32>
    %355 = arith.divf %353, %354 : vector<8x32xf32>
    %c0_153 = arith.constant 0 : index
    %c0_154 = arith.constant 0 : index
    %356 = vector.load %arg10[%c0_153, %c0_154] : memref<8x32xf32, #tpu.memory_space<vmem>>, vector<8x32xf32>
    %357 = arith.mulf %347, %356 : vector<8x32xf32>
    %358 = arith.mulf %341, %349 : vector<8x32xf32>
    %359 = arith.addf %357, %358 : vector<8x32xf32>
    %360 = math.tanh %359 : vector<8x32xf32>
    %361 = arith.mulf %355, %360 : vector<8x32xf32>
    %c0_155 = arith.constant 0 : index
    %c0_156 = arith.constant 0 : index
    %362 = vector.load %arg9[%c0_155, %c0_156] : memref<8x32xf32, #tpu.memory_space<vmem>>, vector<8x32xf32>
    tpu.vector_store %arg9[%c0_155, %c0_156], %361 {strides = array<i32>} : memref<8x32xf32, #tpu.memory_space<vmem>>, vector<8x32xf32>,
    %c0_157 = arith.constant 0 : index
    %c0_158 = arith.constant 0 : index
    %363 = vector.load %arg10[%c0_157, %c0_158] : memref<8x32xf32, #tpu.memory_space<vmem>>, vector<8x32xf32>
    tpu.vector_store %arg10[%c0_157, %c0_158], %359 {strides = array<i32>} : memref<8x32xf32, #tpu.memory_space<vmem>>, vector<8x32xf32>,
    %c0_159 = arith.constant 0 : index
    %364 = arith.index_cast %329 : i32 to index
    %c0_160 = arith.constant 0 : index
    %365 = vector.load %arg5[%c0_159, %364, %c0_160] : memref<1x64x32xf32, #tpu.memory_space<vmem>>, vector<1x8x32xf32>
    %366 = vector.shape_cast %365 : vector<1x8x32xf32> to vector<8x32xf32>
    %367 = vector.shape_cast %361 : vector<8x32xf32> to vector<1x8x32xf32>
    tpu.vector_store %arg5[%c0_159, %364, %c0_160], %367 {strides = array<i32>} : memref<1x64x32xf32, #tpu.memory_space<vmem>>, vector<1x8x32xf32>,
    %c8_i32_161 = arith.constant 8 : i32
    %c0_162 = arith.constant 0 : index
    %c0_163 = arith.constant 0 : index
    %368 = vector.load %arg9[%c0_162, %c0_163] : memref<8x32xf32, #tpu.memory_space<vmem>>, vector<8x32xf32>
    %c0_164 = arith.constant 0 : index
    %c0_165 = arith.constant 0 : index
    %c0_166 = arith.constant 0 : index
    %369 = vector.load %arg6[%c0_164, %c0_165, %c0_166] : memref<1x8x32xf32, #tpu.memory_space<vmem>>, vector<1x8x32xf32>
    %370 = vector.shape_cast %369 : vector<1x8x32xf32> to vector<8x32xf32>
    %371 = vector.shape_cast %368 : vector<8x32xf32> to vector<1x8x32xf32>
    tpu.vector_store %arg6[%c0_164, %c0_165, %c0_166], %371 {strides = array<i32>} : memref<1x8x32xf32, #tpu.memory_space<vmem>>, vector<1x8x32xf32>,
    %c0_167 = arith.constant 0 : index
    %c0_168 = arith.constant 0 : index
    %372 = vector.load %arg10[%c0_167, %c0_168] : memref<8x32xf32, #tpu.memory_space<vmem>>, vector<8x32xf32>
    %c0_169 = arith.constant 0 : index
    %c0_170 = arith.constant 0 : index
    %c0_171 = arith.constant 0 : index
    %373 = vector.load %arg7[%c0_169, %c0_170, %c0_171] : memref<1x8x32xf32, #tpu.memory_space<vmem>>, vector<1x8x32xf32>
    %374 = vector.shape_cast %373 : vector<1x8x32xf32> to vector<8x32xf32>
    %375 = vector.shape_cast %372 : vector<8x32xf32> to vector<1x8x32xf32>
    tpu.vector_store %arg7[%c0_169, %c0_170, %c0_171], %375 {strides = array<i32>} : memref<1x8x32xf32, #tpu.memory_space<vmem>>, vector<1x8x32xf32>,
    return
  }
  func.func @transform_0(%arg0: i32) -> (i32, i32) {
    %c0_i32 = arith.constant 0 : i32
    %c0_i32_0 = arith.constant 0 : i32
    %c0_i32_1 = arith.constant 0 : i32
    return %c0_i32, %c0_i32_0 : i32, i32
  }
  func.func @transform_1(%arg0: i32) -> (i32, i32, i32) {
    %c0_i32 = arith.constant 0 : i32
    %c0_i32_0 = arith.constant 0 : i32
    %c0_i32_1 = arith.constant 0 : i32
    return %arg0, %c0_i32, %c0_i32_0 : i32, i32, i32
  }
  func.func @transform_2(%arg0: i32) -> (i32, i32, i32) {
    %c0_i32 = arith.constant 0 : i32
    %c0_i32_0 = arith.constant 0 : i32
    %c0_i32_1 = arith.constant 0 : i32
    return %arg0, %c0_i32, %c0_i32_0 : i32, i32, i32
  }
  func.func @transform_3(%arg0: i32) -> (i32, i32, i32) {
    %c0_i32 = arith.constant 0 : i32
    %c0_i32_0 = arith.constant 0 : i32
    %c0_i32_1 = arith.constant 0 : i32
    return %arg0, %c0_i32, %c0_i32_0 : i32, i32, i32
  }
  func.func @transform_4(%arg0: i32) -> (i32, i32, i32) {
    %c0_i32 = arith.constant 0 : i32
    %c0_i32_0 = arith.constant 0 : i32
    %c0_i32_1 = arith.constant 0 : i32
    return %arg0, %c0_i32, %c0_i32_0 : i32, i32, i32
  }
  func.func @transform_5(%arg0: i32) -> (i32, i32, i32) {
    %c0_i32 = arith.constant 0 : i32
    %c0_i32_0 = arith.constant 0 : i32
    %c0_i32_1 = arith.constant 0 : i32
    return %arg0, %c0_i32, %c0_i32_0 : i32, i32, i32
  }
  func.func @transform_6(%arg0: i32) -> (i32, i32, i32) {
    %c0_i32 = arith.constant 0 : i32
    %c0_i32_0 = arith.constant 0 : i32
    %c0_i32_1 = arith.constant 0 : i32
    return %arg0, %c0_i32, %c0_i32_0 : i32, i32, i32
  }
}

</mosaic_0001>

<llo_original>
// kernel: tpu_custom_call.1
$region0: #{tpu_custom_call.1}
  #allocation0 [shape = 'u32[]', space=smem, size = 0x4, offset = 0x4, fixed_abs, tag = 'smem constant byte address 0x4 - core index']
  #allocation1 [shape = 'u32[144,128]{1,0:T(1,128)}', space=vmem, size = 0x12000, scoped, tag = 'internal scratch']
  #allocation2 [shape = 'f32[64,128]{1,0:T(8,128)}', space=vmem, size = 0x8000, scoped, tag = 'scratch operand']
  #allocation3 [shape = 'f32[8,32]{1,0:T(8,128)}', space=vmem, size = 0x1000, scoped, tag = 'scratch operand']
  #allocation4 [shape = 'f32[8,32]{1,0:T(8,128)}', space=vmem, size = 0x1000, scoped, tag = 'scratch operand']
  %s0 = inlined_call_operand.vmem [shape: f32[64,32], index: 0, kind: input, shape index: {}]
  %s1 = inlined_call_operand.vmem [shape: bf16[2,32,128], index: 1, kind: input, shape index: {}]
  %s2 = inlined_call_operand.vmem [shape: bf16[2,32,128], index: 2, kind: input, shape index: {}]
  %s3 = inlined_call_operand.vmem [shape: f32[2,1,128], index: 3, kind: input, shape index: {}]
  %s4 = inlined_call_operand.vmem [shape: f32[2,64,32], index: 4, kind: output, shape index: {0}]
  %s5 = inlined_call_operand.hbm [shape: f32[2,8,32], index: 5, kind: output, shape index: {1}]
  %s6 = inlined_call_operand.hbm [shape: f32[2,8,32], index: 6, kind: output, shape index: {2}]
  %7 = xla_tuple %s4, %s5, %s6
  %s8 = sld [smem:[#allocation0]]
  $region65: #{tpu_custom_call.1} parent=0
    _
  %s10 = ssub.s32 1, %s8
  %s11 = scalar_select 0, %s10, %s8
  $region1: #{tpu_custom_call.1} parent=0
    #allocation5 [shape = 'u8[8192]{0}', space=vmem, size = 0x2000, scoped, tag = 'output window, operand 1']
    #allocation6 [shape = 's32[2]{0}', space=sflag, size = 0x8, scoped, tag = 'scoped memory for tpu_custom_call.1']
    #allocation7 [shape = 'u8[8192]{0}', space=vmem, size = 0x2000, scoped, tag = 'output window, operand 2']
    #allocation8 [shape = 's32[2]{0}', space=sflag, size = 0x8, scoped, tag = 'scoped memory for tpu_custom_call.1']
    %12 = vsyncpa [#allocation6], 0
    %s13 = scalar_lea.sflag [#allocation6], 1
    %14 = vsyncpa %s13, 0
    %15 = vsyncpa [#allocation8], 0
    %s16 = scalar_lea.sflag [#allocation8], 1
    %17 = vsyncpa %s16, 0
    loop: start=0, step=1, limit=4
    $region2: #{tpu_custom_call.1} parent=1 // loop_pre_header
      _
    $region3: #{tpu_custom_call.1} parent=1 // loop_header
      %s19 = sphi 0, %s23
      %p20 = scmp.ge.s32.totalorder %s19, 4
      %s27 = sphi 0, %s27
      %s29 = sphi 0, %s27
      %s30 = sphi 0, %s29
      %s44 = sphi 0, %s30
      %s50 = sphi 0, %s52
      %s53 = sphi 0, %s50
      %s54 = sphi 0, %s53
      %s70 = sphi 0, %s54
      %s76 = sphi 0, %s78
      %s79 = sphi 0, %s76
      %s80 = sphi 0, %s79
      %s96 = sphi 0, %s80
      %s102 = sphi 0, %s104
      %s105 = sphi 0, %s102
      %s106 = sphi 0, %s105
      %s122 = sphi 0, %s106
      %s128 = sphi 0, %s130
      %s131 = sphi 0, %s128
      %s132 = sphi 0, %s131
      %s148 = sphi 0, %s132
      %s154 = sphi 0, %s156
      %s157 = sphi 0, %s154
      %s158 = sphi 0, %s157
      %s174 = sphi 0, %s158
      %s180 = sphi 0, %s182
      %s183 = sphi 0, %s180
      %s184 = sphi 0, %s183
      %s200 = sphi 0, %s184
    $region4: #{tpu_custom_call.1} parent=1 // loop_header_branch
      %22 = sbr.rel (%p20) target = $region8
    $region5: #{tpu_custom_call.1} parent=1 // loop_body
      %s24 = ssub.s32 %s19, 1
      %s25 = ssub.s32 %s19, 2
      %s26 = sadd.s32 %s19, 1
      %s28 = sadd.s32 %s27, 1
      %p31 = scmp.eq.s32.totalorder %s19, 1
      %p32 = scmp.ne.s32.totalorder %s27, %s29
      %p33 = scmp.eq.s32.totalorder %s19, 0
      %p34 = por %p32, %p33
      %p35 = scmp.ne.s32.totalorder %s27, %s29
      %p36 = scmp.eq.s32.totalorder %s24, 1
      %p37 = por %p35, %p36
      %p38 = scmp.ne.s32.totalorder %s29, %s30
      %p39 = scmp.eq.s32.totalorder %s24, 0
      %p40 = por %p38, %p39
      %p41 = scmp.ne.s32.totalorder %s29, %s30
      %p42 = scmp.eq.s32.totalorder %s25, 1
      %p43 = por %p41, %p42
      %p45 = scmp.ne.s32.totalorder %s30, %s44
      %p46 = scmp.eq.s32.totalorder %s25, 0
      %p47 = por %p45, %p46
      %s48 = ssub.s32 %s19, %s26
      %p49 = scmp.eq.s32.totalorder %s48, 0
      %s51 = sadd.s32 %s50, 1
      %s52 = scalar_select %p49, %s50, %s51
      %p55 = pneg %p49
      %p56 = scmp.eq.s32.totalorder %s19, 1
      %p57 = por %p55, %p56
      %p58 = scmp.ne.s32.totalorder %s50, %s53
      %p59 = scmp.eq.s32.totalorder %s19, 0
      %p60 = por %p58, %p59
      %p61 = scmp.ne.s32.totalorder %s50, %s53
      %p62 = scmp.eq.s32.totalorder %s24, 1
      %p63 = por %p61, %p62
      %p64 = scmp.ne.s32.totalorder %s53, %s54
      %p65 = scmp.eq.s32.totalorder %s24, 0
      %p66 = por %p64, %p65
      %p67 = scmp.ne.s32.totalorder %s53, %s54
      %p68 = scmp.eq.s32.totalorder %s25, 1
      %p69 = por %p67, %p68
      %p71 = scmp.ne.s32.totalorder %s54, %s70
      %p72 = scmp.eq.s32.totalorder %s25, 0
      %p73 = por %p71, %p72
      %s74 = ssub.s32 %s19, %s26
      %p75 = scmp.eq.s32.totalorder %s74, 0
      %s77 = sadd.s32 %s76, 1
      %s78 = scalar_select %p75, %s76, %s77
      %p81 = pneg %p75
      %p82 = scmp.eq.s32.totalorder %s19, 1
      %p83 = por %p81, %p82
      %p84 = scmp.ne.s32.totalorder %s76, %s79
      %p85 = scmp.eq.s32.totalorder %s19, 0
      %p86 = por %p84, %p85
      %p87 = scmp.ne.s32.totalorder %s76, %s79
      %p88 = scmp.eq.s32.totalorder %s24, 1
      %p89 = por %p87, %p88
      %p90 = scmp.ne.s32.totalorder %s79, %s80
      %p91 = scmp.eq.s32.totalorder %s24, 0
      %p92 = por %p90, %p91
      %p93 = scmp.ne.s32.totalorder %s79, %s80
      %p94 = scmp.eq.s32.totalorder %s25, 1
      %p95 = por %p93, %p94
      %p97 = scmp.ne.s32.totalorder %s80, %s96
      %p98 = scmp.eq.s32.totalorder %s25, 0
      %p99 = por %p97, %p98
      %s100 = ssub.s32 %s19, %s26
      %p101 = scmp.eq.s32.totalorder %s100, 0
      %s103 = sadd.s32 %s102, 1
      %s104 = scalar_select %p101, %s102, %s103
      %p107 = pneg %p101
      %p108 = scmp.eq.s32.totalorder %s19, 1
      %p109 = por %p107, %p108
      %p110 = scmp.ne.s32.totalorder %s102, %s105
      %p111 = scmp.eq.s32.totalorder %s19, 0
      %p112 = por %p110, %p111
      %p113 = scmp.ne.s32.totalorder %s102, %s105
      %p114 = scmp.eq.s32.totalorder %s24, 1
      %p115 = por %p113, %p114
      %p116 = scmp.ne.s32.totalorder %s105, %s106
      %p117 = scmp.eq.s32.totalorder %s24, 0
      %p118 = por %p116, %p117
      %p119 = scmp.ne.s32.totalorder %s105, %s106
      %p120 = scmp.eq.s32.totalorder %s25, 1
      %p121 = por %p119, %p120
      %p123 = scmp.ne.s32.totalorder %s106, %s122
      %p124 = scmp.eq.s32.totalorder %s25, 0
      %p125 = por %p123, %p124
      %s126 = ssub.s32 %s19, %s26
      %p127 = scmp.eq.s32.totalorder %s126, 0
      %s129 = sadd.s32 %s128, 1
      %s130 = scalar_select %p127, %s128, %s129
      %p133 = pneg %p127
      %p134 = scmp.eq.s32.totalorder %s19, 1
      %p135 = por %p133, %p134
      %p136 = scmp.ne.s32.totalorder %s128, %s131
      %p137 = scmp.eq.s32.totalorder %s19, 0
      %p138 = por %p136, %p137
      %p139 = scmp.ne.s32.totalorder %s128, %s131
      %p140 = scmp.eq.s32.totalorder %s24, 1
      %p141 = por %p139, %p140
      %p142 = scmp.ne.s32.totalorder %s131, %s132
      %p143 = scmp.eq.s32.totalorder %s24, 0
      %p144 = por %p142, %p143
      %p145 = scmp.ne.s32.totalorder %s131, %s132
      %p146 = scmp.eq.s32.totalorder %s25, 1
      %p147 = por %p145, %p146
      %p149 = scmp.ne.s32.totalorder %s132, %s148
      %p150 = scmp.eq.s32.totalorder %s25, 0
      %p151 = por %p149, %p150
      %s152 = ssub.s32 %s19, %s26
      %p153 = scmp.eq.s32.totalorder %s152, 0
      %s155 = sadd.s32 %s154, 1
      %s156 = scalar_select %p153, %s154, %s155
      %p159 = pneg %p153
      %p160 = scmp.eq.s32.totalorder %s19, 1
      %p161 = por %p159, %p160
      %p162 = scmp.ne.s32.totalorder %s154, %s157
      %p163 = scmp.eq.s32.totalorder %s19, 0
      %p164 = por %p162, %p163
      %p165 = scmp.ne.s32.totalorder %s154, %s157
      %p166 = scmp.eq.s32.totalorder %s24, 1
      %p167 = por %p165, %p166
      %p168 = scmp.ne.s32.totalorder %s157, %s158
      %p169 = scmp.eq.s32.totalorder %s24, 0
      %p170 = por %p168, %p169
      %p171 = scmp.ne.s32.totalorder %s157, %s158
      %p172 = scmp.eq.s32.totalorder %s25, 1
      %p173 = por %p171, %p172
      %p175 = scmp.ne.s32.totalorder %s158, %s174
      %p176 = scmp.eq.s32.totalorder %s25, 0
      %p177 = por %p175, %p176
      %s178 = ssub.s32 %s19, %s26
      %p179 = scmp.eq.s32.totalorder %s178, 0
      %s181 = sadd.s32 %s180, 1
      %s182 = scalar_select %p179, %s180, %s181
      %p185 = pneg %p179
      %p186 = scmp.eq.s32.totalorder %s19, 1
      %p187 = por %p185, %p186
      %p188 = scmp.ne.s32.totalorder %s180, %s183
      %p189 = scmp.eq.s32.totalorder %s19, 0
      %p190 = por %p188, %p189
      %p191 = scmp.ne.s32.totalorder %s180, %s183
      %p192 = scmp.eq.s32.totalorder %s24, 1
      %p193 = por %p191, %p192
      %p194 = scmp.ne.s32.totalorder %s183, %s184
      %p195 = scmp.eq.s32.totalorder %s24, 0
      %p196 = por %p194, %p195
      %p197 = scmp.ne.s32.totalorder %s183, %s184
      %p198 = scmp.eq.s32.totalorder %s25, 1
      %p199 = por %p197, %p198
      %p201 = scmp.ne.s32.totalorder %s184, %s200
      %p202 = scmp.eq.s32.totalorder %s25, 0
      %p203 = por %p201, %p202
      %p204 = scmp.le.s32.totalorder 1, %s19
      %p205 = scmp.lt.s32.totalorder %s19, 3
      %p206 = pnand %p204, %p205
      %p207 = pneg %p206
      // Predicated region
      $region9: #{tpu_custom_call.1} parent=5 // pred_check
        _
      $region10: #{tpu_custom_call.1} parent=5 // pred_check_branch
        %209 = sbr.rel (%p206) target = $region12
      $region11: #{tpu_custom_call.1} parent=5 // pred_region
        %s210 = ssub.s32 %s19, 1
        // Predicated region
        $region13: #{tpu_custom_call.1} parent=11 // pred_check
          %p211 = pneg %p40
        $region14: #{tpu_custom_call.1} parent=11 // pred_check_branch
          %213 = sbr.rel (%p211) target = $region16
        $region15: #{tpu_custom_call.1} parent=11 // pred_region
          _
        $region16: #{tpu_custom_call.1} parent=11 // pred_fallthru
          _
      $region12: #{tpu_custom_call.1} parent=5 // pred_fallthru
        _
      %p214 = scmp.lt.s32.totalorder %s19, 2
      // Predicated region
      $region17: #{tpu_custom_call.1} parent=5 // pred_check
        %p215 = pneg %p214
      $region18: #{tpu_custom_call.1} parent=5 // pred_check_branch
        %217 = sbr.rel (%p215) target = $region20
      $region19: #{tpu_custom_call.1} parent=5 // pred_region
        // Predicated region
        $region21: #{tpu_custom_call.1} parent=19 // pred_check
          %p218 = pneg %p60
        $region22: #{tpu_custom_call.1} parent=19 // pred_check_branch
          %220 = sbr.rel (%p218) target = $region24
        $region23: #{tpu_custom_call.1} parent=19 // pred_region
          %p221 = scmp.lt.s32.totalorder %s19, 1
          %s222 = scalar_select %p221, %s19, 1
          %s223 = smul.addr %s222, 4
          %s224 = smul.addr %s223, 4
          %s225 = scalar_lea.vmem %s1, %s224
        $region24: #{tpu_custom_call.1} parent=19 // pred_fallthru
          _
        // Predicated region
        $region25: #{tpu_custom_call.1} parent=19 // pred_check
          %p226 = pneg %p86
        $region26: #{tpu_custom_call.1} parent=19 // pred_check_branch
          %228 = sbr.rel (%p226) target = $region28
        $region27: #{tpu_custom_call.1} parent=19 // pred_region
          %p229 = scmp.lt.s32.totalorder %s19, 1
          %s230 = scalar_select %p229, %s19, 1
          %s231 = smul.addr %s230, 4
          %s232 = smul.addr %s231, 4
          %s233 = scalar_lea.vmem %s2, %s232
        $region28: #{tpu_custom_call.1} parent=19 // pred_fallthru
          _
        // Predicated region
        $region29: #{tpu_custom_call.1} parent=19 // pred_check
          %p234 = pneg %p112
        $region30: #{tpu_custom_call.1} parent=19 // pred_check_branch
          %236 = sbr.rel (%p234) target = $region32
        $region31: #{tpu_custom_call.1} parent=19 // pred_region
          %p237 = scmp.lt.s32.totalorder %s19, 1
          %s238 = scalar_select %p237, %s19, 1
          %s239 = scalar_lea.vmem %s3, %s238
        $region32: #{tpu_custom_call.1} parent=19 // pred_fallthru
          _
      $region20: #{tpu_custom_call.1} parent=5 // pred_fallthru
        _
      %p240 = scmp.le.s32.totalorder 1, %s19
      %p241 = scmp.lt.s32.totalorder %s19, 3
      %p242 = pnand %p240, %p241
      %p243 = pneg %p242
      // Predicated region
      $region33: #{tpu_custom_call.1} parent=5 // pred_check
        _
      $region34: #{tpu_custom_call.1} parent=5 // pred_check_branch
        %245 = sbr.rel (%p242) target = $region36
      $region35: #{tpu_custom_call.1} parent=5 // pred_region
        %s246 = ssub.s32 %s19, 1
        %p247 = pneg %p40
        %p248 = pneg %p37
        %p249 = scmp.lt.s32.totalorder %s24, 1
        %s250 = scalar_select %p249, %s24, 1
        %s251 = smul.addr %s250, 4
        %s252 = smul.addr %s251, 4
        %s253 = scalar_lea.vmem %s1, %s252
        %p254 = pneg %p66
        %p255 = pneg %p63
        %p256 = scmp.lt.s32.totalorder %s24, 1
        %s257 = scalar_select %p256, %s24, 1
        %s258 = smul.addr %s257, 4
        %s259 = smul.addr %s258, 4
        %s260 = scalar_lea.vmem %s2, %s259
        %p261 = pneg %p92
        %p262 = pneg %p89
        %p263 = scmp.lt.s32.totalorder %s24, 1
        %s264 = scalar_select %p263, %s24, 1
        %s265 = scalar_lea.vmem %s3, %s264
        %p266 = pneg %p118
        %p267 = pneg %p115
        %p268 = pneg %p144
        %p269 = pneg %p141
        %p270 = scmp.lt.s32.totalorder %s24, 1
        %s271 = scalar_select %p270, %s24, 1
        %s272 = smul.addr %s271, 8
        %s273 = smul.addr %s272, 8
        %s274 = scalar_lea.vmem %s4, %s273
        %p275 = pneg %p170
        %p276 = pneg %p167
        %s277 = sand.u32 %s157, 1
        %s278 = scalar_lea.sflag [#allocation6], %s277
        %s279 = sand.u32 %s157, 1
        %s280 = smul.addr %s279, 8
        %s281 = scalar_lea.vmem [#allocation5], %s280
        %p282 = pneg %p196
        %p283 = pneg %p193
        %s284 = sand.u32 %s183, 1
        %s285 = scalar_lea.sflag [#allocation8], %s284
        %s286 = sand.u32 %s183, 1
        %s287 = smul.addr %s286, 8
        %s288 = scalar_lea.vmem [#allocation7], %s287
        %p289 = scmp.lt.s32.totalorder %s24, 1
        %s290 = scalar_select %p289, %s24, 1
        %s291 = smul.addr %s290, 4
        %s292 = smul.addr %s291, 4
        %s293 = scalar_lea.vmem %s1, %s292
        %p294 = scmp.lt.s32.totalorder %s24, 1
        %s295 = scalar_select %p294, %s24, 1
        %s296 = smul.addr %s295, 4
        %s297 = smul.addr %s296, 4
        %s298 = scalar_lea.vmem %s2, %s297
        %p299 = scmp.lt.s32.totalorder %s24, 1
        %s300 = scalar_select %p299, %s24, 1
        %s301 = scalar_lea.vmem %s3, %s300
        %p302 = scmp.lt.s32.totalorder %s24, 1
        %s303 = scalar_select %p302, %s24, 1
        %s304 = smul.addr %s303, 8
        %s305 = smul.addr %s304, 8
        %s306 = scalar_lea.vmem %s4, %s305
        %v308 = vld [vmem:[%s0] sm:$0xff]
        %v309 = vld [vmem:[%s0 + $0x8] sm:$0xff]
        %v310 = vld [vmem:[%s0 + $0x10] sm:$0xff]
        %v311 = vld [vmem:[%s0 + $0x18] sm:$0xff]
        %v312 = vld [vmem:[%s0 + $0x20] sm:$0xff]
        %v313 = vld [vmem:[%s0 + $0x28] sm:$0xff]
        %v314 = vld [vmem:[%s0 + $0x30] sm:$0xff]
        %v315 = vld [vmem:[%s0 + $0x38] sm:$0xff]
        %v316 = vpack.c.bf16 %v309, %v308
        %v317 = vpack.c.bf16 %v311, %v310
        %v318 = vpack.c.bf16 %v313, %v312
        %v319 = vpack.c.bf16 %v315, %v314
        %v320 = vld [vmem:[%s293] sm:$0xf]
        %v321 = vld [vmem:[%s293 + $0x4] sm:$0xf]
        %v322 = vld [vmem:[%s293 + $0x8] sm:$0xf]
        %v323 = vld [vmem:[%s293 + $0xc] sm:$0xf]
        %v324 = vld [vmem:[%s301] sm:$0x1]
        %v326 = vlaneseq
        %v327 = vshrl.u32 %v326, 7
        %v328 = vsub.s32 0, %v327
        %v329 = vrot.slane %v324, %v328
        %v335 = vunpack.c.l.b16 %v320
        %v336 = vunpack.c.l.b16 %v321
        %v337 = vunpack.c.l.b16 %v322
        %v338 = vunpack.c.l.b16 %v323
        %v339 = vpack.c.b16 %v336, %v335
        %v340 = vpack.c.b16 %v338, %v337
        %vm343 = vcmask 261120
        %v345 = vsel %vm343, %v316, 0
        %v348 = vsel %vm343, %v317, 0
        %v351 = vsel %vm343, %v318, 0
        %v354 = vsel %vm343, %v319, 0
        %356 = vmatprep.subr.bf16.mxu0 0
        %357 = vmatpush1.bf16.msra.mxu0 %v339
        %358 = vmatprep.subr.bf16.mxu0 0
        %359 = vmatpush1.bf16.msra.mxu0 %v340
        %360 = vmatprep.subr.bf16.mxu0 0
        %361 = vmatpush1.bf16.msra.mxu0 0
        %362 = vmatprep.subr.bf16.mxu0 0
        %363 = vmatpush1.bf16.msra.mxu0 0
        %364 = vmatprep.subr.bf16.mxu0 0
        %365 = vmatpush1.bf16.msra.mxu0 0
        %366 = vmatprep.subr.bf16.mxu0 0
        %367 = vmatpush1.bf16.msra.mxu0 0
        %368 = vmatprep.subr.bf16.mxu0 0
        %369 = vmatpush1.bf16.msra.mxu0 0
        %370 = vmatprep.subr.bf16.mxu0 0
        %371 = vmatpush1.bf16.msra.mxu0 0
        %372 = vmatprep.subr.bf16.mxu0 0
        %373 = vmatpush1.bf16.msra.mxu0 0
        %374 = vmatprep.subr.bf16.mxu0 0
        %375 = vmatpush1.bf16.msra.mxu0 0
        %376 = vmatprep.subr.bf16.mxu0 0
        %377 = vmatpush1.bf16.msra.mxu0 0
        %378 = vmatprep.subr.bf16.mxu0 0
        %379 = vmatpush1.bf16.msra.mxu0 0
        %380 = vmatprep.subr.bf16.mxu0 0
        %381 = vmatpush1.bf16.msra.mxu0 0
        %382 = vmatprep.subr.bf16.mxu0 0
        %383 = vmatpush1.bf16.msra.mxu0 0
        %384 = vmatprep.subr.bf16.mxu0 0
        %385 = vmatpush1.bf16.msra.mxu0 0
        %386 = vmatprep.subr.bf16.mxu0 0
        %387 = vmatpush1.bf16.msra.mxu0 0
        %388 = vmatprep.mubr.bf16.mxu0 0
        %389 = vmatmul.mubr.bf16.gmra.mrb[0].mxu0 %v345
        %v390 = vpop.f32.mrb[0].mxu0
        %v391 = vadd.f32 %v329, %v390
        %v392 = vpop.f32.mrb[0].mxu0
        %v393 = vpop.f32.mrb[0].mxu0
        %v394 = vadd.f32 %v329, %v393
        %v395 = vpop.f32.mrb[0].mxu0
        %396 = vmatprep.mubr.bf16.mxu0 0
        %397 = vmatmul.mubr.bf16.gmra.mrb[0].mxu0 %v348
        %v398 = vpop.f32.mrb[0].mxu0
        %v399 = vadd.f32 %v329, %v398
        %v400 = vpop.f32.mrb[0].mxu0
        %v401 = vpop.f32.mrb[0].mxu0
        %v402 = vadd.f32 %v329, %v401
        %v403 = vpop.f32.mrb[0].mxu0
        %404 = vmatprep.mubr.bf16.mxu0 0
        %405 = vmatmul.mubr.bf16.gmra.mrb[0].mxu0 %v351
        %v406 = vpop.f32.mrb[0].mxu0
        %v407 = vadd.f32 %v329, %v406
        %v408 = vpop.f32.mrb[0].mxu0
        %v409 = vpop.f32.mrb[0].mxu0
        %v410 = vadd.f32 %v329, %v409
        %v411 = vpop.f32.mrb[0].mxu0
        %412 = vmatprep.mubr.bf16.mxu0 0
        %413 = vmatmul.mubr.bf16.gmra.mrb[0].mxu0 %v354
        %v414 = vpop.f32.mrb[0].mxu0
        %v415 = vadd.f32 %v329, %v414
        %v416 = vpop.f32.mrb[0].mxu0
        %v417 = vpop.f32.mrb[0].mxu0
        %v418 = vadd.f32 %v329, %v417
        %v419 = vpop.f32.mrb[0].mxu0
        %420 = vdwg.mxu0
        %421 = vst [vmem:[#allocation2] sm:$0xff] %v391
        %422 = vst [vmem:[#allocation2 + $0x8] sm:$0xff] %v394
        %423 = vst [vmem:[#allocation2 + $0x10] sm:$0xff] %v399
        %424 = vst [vmem:[#allocation2 + $0x18] sm:$0xff] %v402
        %425 = vst [vmem:[#allocation2 + $0x20] sm:$0xff] %v407
        %426 = vst [vmem:[#allocation2 + $0x28] sm:$0xff] %v410
        %427 = vst [vmem:[#allocation2 + $0x30] sm:$0xff] %v415
        %428 = vst [vmem:[#allocation2 + $0x38] sm:$0xff] %v418
        %v429 = vld [vmem:[%s298] sm:$0xf]
        %v430 = vld [vmem:[%s298 + $0x4] sm:$0xf]
        %v431 = vld [vmem:[%s298 + $0x8] sm:$0xf]
        %v432 = vld [vmem:[%s298 + $0xc] sm:$0xf]
        %433 = vst.msk [vmem:[#allocation3] sm:$0xff] %vm343, 0.0
        %434 = vst.msk [vmem:[#allocation4] sm:$0xff] %vm343, 0.0
        %s435 = smul.u32 %s24, 56
        %v436 = vld [vmem:[#allocation3] sm:$0xff]
        %s437 = scalar_lea.vmem [#allocation2], %s435
        %v438 = vld [vmem:[%s437] sm:$0xff]
        %v439 = vpack.c.bf16 %v436, %v436
        %v444 = vunpack.c.l.b16 %v429
        %v445 = vunpack.c.l.b16 %v430
        %v446 = vunpack.c.l.b16 %v431
        %v447 = vunpack.c.l.b16 %v432
        %v448 = vpack.c.b16 %v445, %v444
        %v449 = vpack.c.b16 %v447, %v446
        %v453 = vsel %vm343, %v439, 0
        %455 = vmatprep.subr.bf16.mxu0 0
        %456 = vmatpush1.bf16.msra.mxu0 %v448
        %457 = vmatprep.subr.bf16.mxu0 0
        %458 = vmatpush1.bf16.msra.mxu0 %v449
        %459 = vmatprep.subr.bf16.mxu0 0
        %460 = vmatpush1.bf16.msra.mxu0 0
        %461 = vmatprep.subr.bf16.mxu0 0
        %462 = vmatpush1.bf16.msra.mxu0 0
        %463 = vmatprep.subr.bf16.mxu0 0
        %464 = vmatpush1.bf16.msra.mxu0 0
        %465 = vmatprep.subr.bf16.mxu0 0
        %466 = vmatpush1.bf16.msra.mxu0 0
        %467 = vmatprep.subr.bf16.mxu0 0
        %468 = vmatpush1.bf16.msra.mxu0 0
        %469 = vmatprep.subr.bf16.mxu0 0
        %470 = vmatpush1.bf16.msra.mxu0 0
        %471 = vmatprep.subr.bf16.mxu0 0
        %472 = vmatpush1.bf16.msra.mxu0 0
        %473 = vmatprep.subr.bf16.mxu0 0
        %474 = vmatpush1.bf16.msra.mxu0 0
        %475 = vmatprep.subr.bf16.mxu0 0
        %476 = vmatpush1.bf16.msra.mxu0 0
        %477 = vmatprep.subr.bf16.mxu0 0
        %478 = vmatpush1.bf16.msra.mxu0 0
        %479 = vmatprep.subr.bf16.mxu0 0
        %480 = vmatpush1.bf16.msra.mxu0 0
        %481 = vmatprep.subr.bf16.mxu0 0
        %482 = vmatpush1.bf16.msra.mxu0 0
        %483 = vmatprep.subr.bf16.mxu0 0
        %484 = vmatpush1.bf16.msra.mxu0 0
        %485 = vmatprep.subr.bf16.mxu0 0
        %486 = vmatpush1.bf16.msra.mxu0 0
        %487 = vmatprep.mubr.bf16.mxu0 0
        %488 = vmatmul.mubr.bf16.gmra.mrb[0].mxu0 %v453
        %v489 = vpop.f32.mrb[0].mxu0
        %v490 = vadd.f32 0.0, %v489
        %v491 = vpop.f32.mrb[0].mxu0
        %v492 = vpop.f32.mrb[0].mxu0
        %v493 = vpop.f32.mrb[0].mxu0
        %494 = vdwg.mxu0
        %v495 = vadd.f32 %v438, %v490
        %v496 = vxor.u32 %v495, 2147483648
        %v497 = vmul.f32 %v496, 1.442695
        %v498 = vpow.pop %v497
        %v499 = vadd.f32 %v498, 1.0
        %v500 = vrcp.pop %v499
        %v501 = vmul.f32 1.0, %v500
        %v502 = vtanh.pop %v495
        %v503 = vld [vmem:[#allocation4] sm:$0xff]
        %505 = vrot.lane.b32.xlu0 %v503, 32
        %v506 = vpop.permute.xlu0 %505
        %v508 = vmul.f32 %v501, %v506
        %510 = vrot.lane.b32.xlu0 %v502, 64
        %v511 = vpop.permute.xlu0 %510
        %v513 = vmul.f32 %v501, %v511
        %515 = vrot.lane.b32.xlu0 %v513, 32
        %v516 = vpop.permute.xlu0 %515
        %v518 = vadd.f32 %v508, %v516
        %v519 = vtanh.pop %v518
        %521 = vrot.lane.b32.xlu0 %v519, 64
        %v522 = vpop.permute.xlu0 %521
        %v524 = vmul.f32 %v501, %v522
        %526 = vrot.lane.b32.xlu0 %v524, 32
        %v527 = vpop.permute.xlu0 %526
        %529 = vst.msk [vmem:[#allocation3] sm:$0xff] %vm343, %v527
        %531 = vrot.lane.b32.xlu0 %v518, 96
        %v532 = vpop.permute.xlu0 %531
        %534 = vst.msk [vmem:[#allocation4] sm:$0xff] %vm343, %v532
        %s535 = scalar_lea.vmem %s306, %s435
        %536 = vst.msk [vmem:[%s535] sm:$0xff] %vm343, %v527
        %s537 = smul.u32 %s24, 5
        %s538 = sadd.s32 %s537, 1
        %s539 = smul.u32 %s538, 8
        %v540 = vld [vmem:[#allocation3] sm:$0xff]
        %s541 = scalar_lea.vmem [#allocation2], %s539
        %v542 = vld [vmem:[%s541] sm:$0xff]
        %v543 = vpack.c.bf16 %v540, %v540
        %v545 = vsel %vm343, %v543, 0
        %547 = vmatprep.subr.bf16.mxu0 0
        %548 = vmatpush1.bf16.msra.mxu0 %v448
        %549 = vmatprep.subr.bf16.mxu0 0
        %550 = vmatpush1.bf16.msra.mxu0 %v449
        %551 = vmatprep.subr.bf16.mxu0 0
        %552 = vmatpush1.bf16.msra.mxu0 0
        %553 = vmatprep.subr.bf16.mxu0 0
        %554 = vmatpush1.bf16.msra.mxu0 0
        %555 = vmatprep.subr.bf16.mxu0 0
        %556 = vmatpush1.bf16.msra.mxu0 0
        %557 = vmatprep.subr.bf16.mxu0 0
        %558 = vmatpush1.bf16.msra.mxu0 0
        %559 = vmatprep.subr.bf16.mxu0 0
        %560 = vmatpush1.bf16.msra.mxu0 0
        %561 = vmatprep.subr.bf16.mxu0 0
        %562 = vmatpush1.bf16.msra.mxu0 0
        %563 = vmatprep.subr.bf16.mxu0 0
        %564 = vmatpush1.bf16.msra.mxu0 0
        %565 = vmatprep.subr.bf16.mxu0 0
        %566 = vmatpush1.bf16.msra.mxu0 0
        %567 = vmatprep.subr.bf16.mxu0 0
        %568 = vmatpush1.bf16.msra.mxu0 0
        %569 = vmatprep.subr.bf16.mxu0 0
        %570 = vmatpush1.bf16.msra.mxu0 0
        %571 = vmatprep.subr.bf16.mxu0 0
        %572 = vmatpush1.bf16.msra.mxu0 0
        %573 = vmatprep.subr.bf16.mxu0 0
        %574 = vmatpush1.bf16.msra.mxu0 0
        %575 = vmatprep.subr.bf16.mxu0 0
        %576 = vmatpush1.bf16.msra.mxu0 0
        %577 = vmatprep.subr.bf16.mxu0 0
        %578 = vmatpush1.bf16.msra.mxu0 0
        %579 = vmatprep.mubr.bf16.mxu0 0
        %580 = vmatmul.mubr.bf16.gmra.mrb[0].mxu0 %v545
        %v581 = vpop.f32.mrb[0].mxu0
        %v582 = vadd.f32 0.0, %v581
        %v583 = vpop.f32.mrb[0].mxu0
        %v584 = vpop.f32.mrb[0].mxu0
        %v585 = vpop.f32.mrb[0].mxu0
        %586 = vdwg.mxu0
        %v587 = vadd.f32 %v542, %v582
        %v588 = vxor.u32 %v587, 2147483648
        %v589 = vmul.f32 %v588, 1.442695
        %v590 = vpow.pop %v589
        %v591 = vadd.f32 %v590, 1.0
        %v592 = vrcp.pop %v591
        %v593 = vmul.f32 1.0, %v592
        %v594 = vtanh.pop %v587
        %v595 = vld [vmem:[#allocation4] sm:$0xff]
        %597 = vrot.lane.b32.xlu0 %v595, 32
        %v598 = vpop.permute.xlu0 %597
        %v600 = vmul.f32 %v593, %v598
        %602 = vrot.lane.b32.xlu0 %v594, 64
        %v603 = vpop.permute.xlu0 %602
        %v605 = vmul.f32 %v593, %v603
        %607 = vrot.lane.b32.xlu0 %v605, 32
        %v608 = vpop.permute.xlu0 %607
        %v610 = vadd.f32 %v600, %v608
        %v611 = vtanh.pop %v610
        %613 = vrot.lane.b32.xlu0 %v611, 64
        %v614 = vpop.permute.xlu0 %613
        %v616 = vmul.f32 %v593, %v614
        %618 = vrot.lane.b32.xlu0 %v616, 32
        %v619 = vpop.permute.xlu0 %618
        %621 = vst.msk [vmem:[#allocation3] sm:$0xff] %vm343, %v619
        %623 = vrot.lane.b32.xlu0 %v610, 96
        %v624 = vpop.permute.xlu0 %623
        %626 = vst.msk [vmem:[#allocation4] sm:$0xff] %vm343, %v624
        %s627 = scalar_lea.vmem %s306, %s539
        %628 = vst.msk [vmem:[%s627] sm:$0xff] %vm343, %v619
        %s629 = smul.u32 %s24, 3
        %s630 = sadd.s32 %s629, 2
        %s631 = smul.u32 %s630, 8
        %v632 = vld [vmem:[#allocation3] sm:$0xff]
        %s633 = scalar_lea.vmem [#allocation2], %s631
        %v634 = vld [vmem:[%s633] sm:$0xff]
        %v635 = vpack.c.bf16 %v632, %v632
        %v637 = vsel %vm343, %v635, 0
        %639 = vmatprep.subr.bf16.mxu0 0
        %640 = vmatpush1.bf16.msra.mxu0 %v448
        %641 = vmatprep.subr.bf16.mxu0 0
        %642 = vmatpush1.bf16.msra.mxu0 %v449
        %643 = vmatprep.subr.bf16.mxu0 0
        %644 = vmatpush1.bf16.msra.mxu0 0
        %645 = vmatprep.subr.bf16.mxu0 0
        %646 = vmatpush1.bf16.msra.mxu0 0
        %647 = vmatprep.subr.bf16.mxu0 0
        %648 = vmatpush1.bf16.msra.mxu0 0
        %649 = vmatprep.subr.bf16.mxu0 0
        %650 = vmatpush1.bf16.msra.mxu0 0
        %651 = vmatprep.subr.bf16.mxu0 0
        %652 = vmatpush1.bf16.msra.mxu0 0
        %653 = vmatprep.subr.bf16.mxu0 0
        %654 = vmatpush1.bf16.msra.mxu0 0
        %655 = vmatprep.subr.bf16.mxu0 0
        %656 = vmatpush1.bf16.msra.mxu0 0
        %657 = vmatprep.subr.bf16.mxu0 0
        %658 = vmatpush1.bf16.msra.mxu0 0
        %659 = vmatprep.subr.bf16.mxu0 0
        %660 = vmatpush1.bf16.msra.mxu0 0
        %661 = vmatprep.subr.bf16.mxu0 0
        %662 = vmatpush1.bf16.msra.mxu0 0
        %663 = vmatprep.subr.bf16.mxu0 0
        %664 = vmatpush1.bf16.msra.mxu0 0
        %665 = vmatprep.subr.bf16.mxu0 0
        %666 = vmatpush1.bf16.msra.mxu0 0
        %667 = vmatprep.subr.bf16.mxu0 0
        %668 = vmatpush1.bf16.msra.mxu0 0
        %669 = vmatprep.subr.bf16.mxu0 0
        %670 = vmatpush1.bf16.msra.mxu0 0
        %671 = vmatprep.mubr.bf16.mxu0 0
        %672 = vmatmul.mubr.bf16.gmra.mrb[0].mxu0 %v637
        %v673 = vpop.f32.mrb[0].mxu0
        %v674 = vadd.f32 0.0, %v673
        %v675 = vpop.f32.mrb[0].mxu0
        %v676 = vpop.f32.mrb[0].mxu0
        %v677 = vpop.f32.mrb[0].mxu0
        %678 = vdwg.mxu0
        %v679 = vadd.f32 %v634, %v674
        %v680 = vxor.u32 %v679, 2147483648
        %v681 = vmul.f32 %v680, 1.442695
        %v682 = vpow.pop %v681
        %v683 = vadd.f32 %v682, 1.0
        %v684 = vrcp.pop %v683
        %v685 = vmul.f32 1.0, %v684
        %v686 = vtanh.pop %v679
        %v687 = vld [vmem:[#allocation4] sm:$0xff]
        %689 = vrot.lane.b32.xlu0 %v687, 32
        %v690 = vpop.permute.xlu0 %689
        %v692 = vmul.f32 %v685, %v690
        %694 = vrot.lane.b32.xlu0 %v686, 64
        %v695 = vpop.permute.xlu0 %694
        %v697 = vmul.f32 %v685, %v695
        %699 = vrot.lane.b32.xlu0 %v697, 32
        %v700 = vpop.permute.xlu0 %699
        %v702 = vadd.f32 %v692, %v700
        %v703 = vtanh.pop %v702
        %705 = vrot.lane.b32.xlu0 %v703, 64
        %v706 = vpop.permute.xlu0 %705
        %v708 = vmul.f32 %v685, %v706
        %710 = vrot.lane.b32.xlu0 %v708, 32
        %v711 = vpop.permute.xlu0 %710
        %713 = vst.msk [vmem:[#allocation3] sm:$0xff] %vm343, %v711
        %715 = vrot.lane.b32.xlu0 %v702, 96
        %v716 = vpop.permute.xlu0 %715
        %718 = vst.msk [vmem:[#allocation4] sm:$0xff] %vm343, %v716
        %s719 = scalar_lea.vmem %s306, %s631
        %720 = vst.msk [vmem:[%s719] sm:$0xff] %vm343, %v711
        %s721 = sadd.s32 %s24, 3
        %s722 = smul.u32 %s721, 8
        %v723 = vld [vmem:[#allocation3] sm:$0xff]
        %s724 = scalar_lea.vmem [#allocation2], %s722
        %v725 = vld [vmem:[%s724] sm:$0xff]
        %v726 = vpack.c.bf16 %v723, %v723
        %v728 = vsel %vm343, %v726, 0
        %730 = vmatprep.subr.bf16.mxu0 0
        %731 = vmatpush1.bf16.msra.mxu0 %v448
        %732 = vmatprep.subr.bf16.mxu0 0
        %733 = vmatpush1.bf16.msra.mxu0 %v449
        %734 = vmatprep.subr.bf16.mxu0 0
        %735 = vmatpush1.bf16.msra.mxu0 0
        %736 = vmatprep.subr.bf16.mxu0 0
        %737 = vmatpush1.bf16.msra.mxu0 0
        %738 = vmatprep.subr.bf16.mxu0 0
        %739 = vmatpush1.bf16.msra.mxu0 0
        %740 = vmatprep.subr.bf16.mxu0 0
        %741 = vmatpush1.bf16.msra.mxu0 0
        %742 = vmatprep.subr.bf16.mxu0 0
        %743 = vmatpush1.bf16.msra.mxu0 0
        %744 = vmatprep.subr.bf16.mxu0 0
        %745 = vmatpush1.bf16.msra.mxu0 0
        %746 = vmatprep.subr.bf16.mxu0 0
        %747 = vmatpush1.bf16.msra.mxu0 0
        %748 = vmatprep.subr.bf16.mxu0 0
        %749 = vmatpush1.bf16.msra.mxu0 0
        %750 = vmatprep.subr.bf16.mxu0 0
        %751 = vmatpush1.bf16.msra.mxu0 0
        %752 = vmatprep.subr.bf16.mxu0 0
        %753 = vmatpush1.bf16.msra.mxu0 0
        %754 = vmatprep.subr.bf16.mxu0 0
        %755 = vmatpush1.bf16.msra.mxu0 0
        %756 = vmatprep.subr.bf16.mxu0 0
        %757 = vmatpush1.bf16.msra.mxu0 0
        %758 = vmatprep.subr.bf16.mxu0 0
        %759 = vmatpush1.bf16.msra.mxu0 0
        %760 = vmatprep.subr.bf16.mxu0 0
        %761 = vmatpush1.bf16.msra.mxu0 0
        %762 = vmatprep.mubr.bf16.mxu0 0
        %763 = vmatmul.mubr.bf16.gmra.mrb[0].mxu0 %v728
        %v764 = vpop.f32.mrb[0].mxu0
        %v765 = vadd.f32 0.0, %v764
        %v766 = vpop.f32.mrb[0].mxu0
        %v767 = vpop.f32.mrb[0].mxu0
        %v768 = vpop.f32.mrb[0].mxu0
        %769 = vdwg.mxu0
        %v770 = vadd.f32 %v725, %v765
        %v771 = vxor.u32 %v770, 2147483648
        %v772 = vmul.f32 %v771, 1.442695
        %v773 = vpow.pop %v772
        %v774 = vadd.f32 %v773, 1.0
        %v775 = vrcp.pop %v774
        %v776 = vmul.f32 1.0, %v775
        %v777 = vtanh.pop %v770
        %v778 = vld [vmem:[#allocation4] sm:$0xff]
        %780 = vrot.lane.b32.xlu0 %v778, 32
        %v781 = vpop.permute.xlu0 %780
        %v783 = vmul.f32 %v776, %v781
        %785 = vrot.lane.b32.xlu0 %v777, 64
        %v786 = vpop.permute.xlu0 %785
        %v788 = vmul.f32 %v776, %v786
        %790 = vrot.lane.b32.xlu0 %v788, 32
        %v791 = vpop.permute.xlu0 %790
        %v793 = vadd.f32 %v783, %v791
        %v794 = vtanh.pop %v793
        %796 = vrot.lane.b32.xlu0 %v794, 64
        %v797 = vpop.permute.xlu0 %796
        %v799 = vmul.f32 %v776, %v797
        %801 = vrot.lane.b32.xlu0 %v799, 32
        %v802 = vpop.permute.xlu0 %801
        %804 = vst.msk [vmem:[#allocation3] sm:$0xff] %vm343, %v802
        %806 = vrot.lane.b32.xlu0 %v793, 96
        %v807 = vpop.permute.xlu0 %806
        %809 = vst.msk [vmem:[#allocation4] sm:$0xff] %vm343, %v807
        %s810 = scalar_lea.vmem %s306, %s722
        %811 = vst.msk [vmem:[%s810] sm:$0xff] %vm343, %v802
        %s812 = ssub.s32 4, %s24
        %s813 = smul.u32 %s812, 8
        %v814 = vld [vmem:[#allocation3] sm:$0xff]
        %s815 = scalar_lea.vmem [#allocation2], %s813
        %v816 = vld [vmem:[%s815] sm:$0xff]
        %v817 = vpack.c.bf16 %v814, %v814
        %v819 = vsel %vm343, %v817, 0
        %821 = vmatprep.subr.bf16.mxu0 0
        %822 = vmatpush1.bf16.msra.mxu0 %v448
        %823 = vmatprep.subr.bf16.mxu0 0
        %824 = vmatpush1.bf16.msra.mxu0 %v449
        %825 = vmatprep.subr.bf16.mxu0 0
        %826 = vmatpush1.bf16.msra.mxu0 0
        %827 = vmatprep.subr.bf16.mxu0 0
        %828 = vmatpush1.bf16.msra.mxu0 0
        %829 = vmatprep.subr.bf16.mxu0 0
        %830 = vmatpush1.bf16.msra.mxu0 0
        %831 = vmatprep.subr.bf16.mxu0 0
        %832 = vmatpush1.bf16.msra.mxu0 0
        %833 = vmatprep.subr.bf16.mxu0 0
        %834 = vmatpush1.bf16.msra.mxu0 0
        %835 = vmatprep.subr.bf16.mxu0 0
        %836 = vmatpush1.bf16.msra.mxu0 0
        %837 = vmatprep.subr.bf16.mxu0 0
        %838 = vmatpush1.bf16.msra.mxu0 0
        %839 = vmatprep.subr.bf16.mxu0 0
        %840 = vmatpush1.bf16.msra.mxu0 0
        %841 = vmatprep.subr.bf16.mxu0 0
        %842 = vmatpush1.bf16.msra.mxu0 0
        %843 = vmatprep.subr.bf16.mxu0 0
        %844 = vmatpush1.bf16.msra.mxu0 0
        %845 = vmatprep.subr.bf16.mxu0 0
        %846 = vmatpush1.bf16.msra.mxu0 0
        %847 = vmatprep.subr.bf16.mxu0 0
        %848 = vmatpush1.bf16.msra.mxu0 0
        %849 = vmatprep.subr.bf16.mxu0 0
        %850 = vmatpush1.bf16.msra.mxu0 0
        %851 = vmatprep.subr.bf16.mxu0 0
        %852 = vmatpush1.bf16.msra.mxu0 0
        %853 = vmatprep.mubr.bf16.mxu0 0
        %854 = vmatmul.mubr.bf16.gmra.mrb[0].mxu0 %v819
        %v855 = vpop.f32.mrb[0].mxu0
        %v856 = vadd.f32 0.0, %v855
        %v857 = vpop.f32.mrb[0].mxu0
        %v858 = vpop.f32.mrb[0].mxu0
        %v859 = vpop.f32.mrb[0].mxu0
        %860 = vdwg.mxu0
        %v861 = vadd.f32 %v816, %v856
        %v862 = vxor.u32 %v861, 2147483648
        %v863 = vmul.f32 %v862, 1.442695
        %v864 = vpow.pop %v863
        %v865 = vadd.f32 %v864, 1.0
        %v866 = vrcp.pop %v865
        %v867 = vmul.f32 1.0, %v866
        %v868 = vtanh.pop %v861
        %v869 = vld [vmem:[#allocation4] sm:$0xff]
        %871 = vrot.lane.b32.xlu0 %v869, 32
        %v872 = vpop.permute.xlu0 %871
        %v874 = vmul.f32 %v867, %v872
        %876 = vrot.lane.b32.xlu0 %v868, 64
        %v877 = vpop.permute.xlu0 %876
        %v879 = vmul.f32 %v867, %v877
        %881 = vrot.lane.b32.xlu0 %v879, 32
        %v882 = vpop.permute.xlu0 %881
        %v884 = vadd.f32 %v874, %v882
        %v885 = vtanh.pop %v884
        %887 = vrot.lane.b32.xlu0 %v885, 64
        %v888 = vpop.permute.xlu0 %887
        %v890 = vmul.f32 %v867, %v888
        %892 = vrot.lane.b32.xlu0 %v890, 32
        %v893 = vpop.permute.xlu0 %892
        %895 = vst.msk [vmem:[#allocation3] sm:$0xff] %vm343, %v893
        %897 = vrot.lane.b32.xlu0 %v884, 96
        %v898 = vpop.permute.xlu0 %897
        %900 = vst.msk [vmem:[#allocation4] sm:$0xff] %vm343, %v898
        %s901 = scalar_lea.vmem %s306, %s813
        %902 = vst.msk [vmem:[%s901] sm:$0xff] %vm343, %v893
        %s903 = smul.u32 %s24, 4294967293
        %s904 = sadd.s32 %s903, 5
        %s905 = smul.u32 %s904, 8
        %v906 = vld [vmem:[#allocation3] sm:$0xff]
        %s907 = scalar_lea.vmem [#allocation2], %s905
        %v908 = vld [vmem:[%s907] sm:$0xff]
        %v909 = vpack.c.bf16 %v906, %v906
        %v911 = vsel %vm343, %v909, 0
        %913 = vmatprep.subr.bf16.mxu0 0
        %914 = vmatpush1.bf16.msra.mxu0 %v448
        %915 = vmatprep.subr.bf16.mxu0 0
        %916 = vmatpush1.bf16.msra.mxu0 %v449
        %917 = vmatprep.subr.bf16.mxu0 0
        %918 = vmatpush1.bf16.msra.mxu0 0
        %919 = vmatprep.subr.bf16.mxu0 0
        %920 = vmatpush1.bf16.msra.mxu0 0
        %921 = vmatprep.subr.bf16.mxu0 0
        %922 = vmatpush1.bf16.msra.mxu0 0
        %923 = vmatprep.subr.bf16.mxu0 0
        %924 = vmatpush1.bf16.msra.mxu0 0
        %925 = vmatprep.subr.bf16.mxu0 0
        %926 = vmatpush1.bf16.msra.mxu0 0
        %927 = vmatprep.subr.bf16.mxu0 0
        %928 = vmatpush1.bf16.msra.mxu0 0
        %929 = vmatprep.subr.bf16.mxu0 0
        %930 = vmatpush1.bf16.msra.mxu0 0
        %931 = vmatprep.subr.bf16.mxu0 0
        %932 = vmatpush1.bf16.msra.mxu0 0
        %933 = vmatprep.subr.bf16.mxu0 0
        %934 = vmatpush1.bf16.msra.mxu0 0
        %935 = vmatprep.subr.bf16.mxu0 0
        %936 = vmatpush1.bf16.msra.mxu0 0
        %937 = vmatprep.subr.bf16.mxu0 0
        %938 = vmatpush1.bf16.msra.mxu0 0
        %939 = vmatprep.subr.bf16.mxu0 0
        %940 = vmatpush1.bf16.msra.mxu0 0
        %941 = vmatprep.subr.bf16.mxu0 0
        %942 = vmatpush1.bf16.msra.mxu0 0
        %943 = vmatprep.subr.bf16.mxu0 0
        %944 = vmatpush1.bf16.msra.mxu0 0
        %945 = vmatprep.mubr.bf16.mxu0 0
        %946 = vmatmul.mubr.bf16.gmra.mrb[0].mxu0 %v911
        %v947 = vpop.f32.mrb[0].mxu0
        %v948 = vadd.f32 0.0, %v947
        %v949 = vpop.f32.mrb[0].mxu0
        %v950 = vpop.f32.mrb[0].mxu0
        %v951 = vpop.f32.mrb[0].mxu0
        %952 = vdwg.mxu0
        %v953 = vadd.f32 %v908, %v948
        %v954 = vxor.u32 %v953, 2147483648
        %v955 = vmul.f32 %v954, 1.442695
        %v956 = vpow.pop %v955
        %v957 = vadd.f32 %v956, 1.0
        %v958 = vrcp.pop %v957
        %v959 = vmul.f32 1.0, %v958
        %v960 = vtanh.pop %v953
        %v961 = vld [vmem:[#allocation4] sm:$0xff]
        %963 = vrot.lane.b32.xlu0 %v961, 32
        %v964 = vpop.permute.xlu0 %963
        %v966 = vmul.f32 %v959, %v964
        %968 = vrot.lane.b32.xlu0 %v960, 64
        %v969 = vpop.permute.xlu0 %968
        %v971 = vmul.f32 %v959, %v969
        %973 = vrot.lane.b32.xlu0 %v971, 32
        %v974 = vpop.permute.xlu0 %973
        %v976 = vadd.f32 %v966, %v974
        %v977 = vtanh.pop %v976
        %979 = vrot.lane.b32.xlu0 %v977, 64
        %v980 = vpop.permute.xlu0 %979
        %v982 = vmul.f32 %v959, %v980
        %984 = vrot.lane.b32.xlu0 %v982, 32
        %v985 = vpop.permute.xlu0 %984
        %987 = vst.msk [vmem:[#allocation3] sm:$0xff] %vm343, %v985
        %989 = vrot.lane.b32.xlu0 %v976, 96
        %v990 = vpop.permute.xlu0 %989
        %992 = vst.msk [vmem:[#allocation4] sm:$0xff] %vm343, %v990
        %s993 = scalar_lea.vmem %s306, %s905
        %994 = vst.msk [vmem:[%s993] sm:$0xff] %vm343, %v985
        %s995 = smul.u32 %s24, 4294967291
        %s996 = sadd.s32 %s995, 6
        %s997 = smul.u32 %s996, 8
        %v998 = vld [vmem:[#allocation3] sm:$0xff]
        %s999 = scalar_lea.vmem [#allocation2], %s997
        %v1000 = vld [vmem:[%s999] sm:$0xff]
        %v1001 = vpack.c.bf16 %v998, %v998
        %v1003 = vsel %vm343, %v1001, 0
        %1005 = vmatprep.subr.bf16.mxu0 0
        %1006 = vmatpush1.bf16.msra.mxu0 %v448
        %1007 = vmatprep.subr.bf16.mxu0 0
        %1008 = vmatpush1.bf16.msra.mxu0 %v449
        %1009 = vmatprep.subr.bf16.mxu0 0
        %1010 = vmatpush1.bf16.msra.mxu0 0
        %1011 = vmatprep.subr.bf16.mxu0 0
        %1012 = vmatpush1.bf16.msra.mxu0 0
        %1013 = vmatprep.subr.bf16.mxu0 0
        %1014 = vmatpush1.bf16.msra.mxu0 0
        %1015 = vmatprep.subr.bf16.mxu0 0
        %1016 = vmatpush1.bf16.msra.mxu0 0
        %1017 = vmatprep.subr.bf16.mxu0 0
        %1018 = vmatpush1.bf16.msra.mxu0 0
        %1019 = vmatprep.subr.bf16.mxu0 0
        %1020 = vmatpush1.bf16.msra.mxu0 0
        %1021 = vmatprep.subr.bf16.mxu0 0
        %1022 = vmatpush1.bf16.msra.mxu0 0
        %1023 = vmatprep.subr.bf16.mxu0 0
        %1024 = vmatpush1.bf16.msra.mxu0 0
        %1025 = vmatprep.subr.bf16.mxu0 0
        %1026 = vmatpush1.bf16.msra.mxu0 0
        %1027 = vmatprep.subr.bf16.mxu0 0
        %1028 = vmatpush1.bf16.msra.mxu0 0
        %1029 = vmatprep.subr.bf16.mxu0 0
        %1030 = vmatpush1.bf16.msra.mxu0 0
        %1031 = vmatprep.subr.bf16.mxu0 0
        %1032 = vmatpush1.bf16.msra.mxu0 0
        %1033 = vmatprep.subr.bf16.mxu0 0
        %1034 = vmatpush1.bf16.msra.mxu0 0
        %1035 = vmatprep.subr.bf16.mxu0 0
        %1036 = vmatpush1.bf16.msra.mxu0 0
        %1037 = vmatprep.mubr.bf16.mxu0 0
        %1038 = vmatmul.mubr.bf16.gmra.mrb[0].mxu0 %v1003
        %v1039 = vpop.f32.mrb[0].mxu0
        %v1040 = vadd.f32 0.0, %v1039
        %v1041 = vpop.f32.mrb[0].mxu0
        %v1042 = vpop.f32.mrb[0].mxu0
        %v1043 = vpop.f32.mrb[0].mxu0
        %1044 = vdwg.mxu0
        %v1045 = vadd.f32 %v1000, %v1040
        %v1046 = vxor.u32 %v1045, 2147483648
        %v1047 = vmul.f32 %v1046, 1.442695
        %v1048 = vpow.pop %v1047
        %v1049 = vadd.f32 %v1048, 1.0
        %v1050 = vrcp.pop %v1049
        %v1051 = vmul.f32 1.0, %v1050
        %v1052 = vtanh.pop %v1045
        %v1053 = vld [vmem:[#allocation4] sm:$0xff]
        %1055 = vrot.lane.b32.xlu0 %v1053, 32
        %v1056 = vpop.permute.xlu0 %1055
        %v1058 = vmul.f32 %v1051, %v1056
        %1060 = vrot.lane.b32.xlu0 %v1052, 64
        %v1061 = vpop.permute.xlu0 %1060
        %v1063 = vmul.f32 %v1051, %v1061
        %1065 = vrot.lane.b32.xlu0 %v1063, 32
        %v1066 = vpop.permute.xlu0 %1065
        %v1068 = vadd.f32 %v1058, %v1066
        %v1069 = vtanh.pop %v1068
        %1071 = vrot.lane.b32.xlu0 %v1069, 64
        %v1072 = vpop.permute.xlu0 %1071
        %v1074 = vmul.f32 %v1051, %v1072
        %1076 = vrot.lane.b32.xlu0 %v1074, 32
        %v1077 = vpop.permute.xlu0 %1076
        %1079 = vst.msk [vmem:[#allocation3] sm:$0xff] %vm343, %v1077
        %1081 = vrot.lane.b32.xlu0 %v1068, 96
        %v1082 = vpop.permute.xlu0 %1081
        %1084 = vst.msk [vmem:[#allocation4] sm:$0xff] %vm343, %v1082
        %s1085 = scalar_lea.vmem %s306, %s997
        %1086 = vst.msk [vmem:[%s1085] sm:$0xff] %vm343, %v1077
        %s1087 = smul.u32 %s24, 4294967289
        %s1088 = sadd.s32 %s1087, 7
        %s1089 = smul.u32 %s1088, 8
        %v1090 = vld [vmem:[#allocation3] sm:$0xff]
        %s1091 = scalar_lea.vmem [#allocation2], %s1089
        %v1092 = vld [vmem:[%s1091] sm:$0xff]
        %v1093 = vpack.c.bf16 %v1090, %v1090
        %v1095 = vsel %vm343, %v1093, 0
        %1097 = vmatprep.subr.bf16.mxu0 0
        %1098 = vmatpush1.bf16.msra.mxu0 %v448
        %1099 = vmatprep.subr.bf16.mxu0 0
        %1100 = vmatpush1.bf16.msra.mxu0 %v449
        %1101 = vmatprep.subr.bf16.mxu0 0
        %1102 = vmatpush1.bf16.msra.mxu0 0
        %1103 = vmatprep.subr.bf16.mxu0 0
        %1104 = vmatpush1.bf16.msra.mxu0 0
        %1105 = vmatprep.subr.bf16.mxu0 0
        %1106 = vmatpush1.bf16.msra.mxu0 0
        %1107 = vmatprep.subr.bf16.mxu0 0
        %1108 = vmatpush1.bf16.msra.mxu0 0
        %1109 = vmatprep.subr.bf16.mxu0 0
        %1110 = vmatpush1.bf16.msra.mxu0 0
        %1111 = vmatprep.subr.bf16.mxu0 0
        %1112 = vmatpush1.bf16.msra.mxu0 0
        %1113 = vmatprep.subr.bf16.mxu0 0
        %1114 = vmatpush1.bf16.msra.mxu0 0
        %1115 = vmatprep.subr.bf16.mxu0 0
        %1116 = vmatpush1.bf16.msra.mxu0 0
        %1117 = vmatprep.subr.bf16.mxu0 0
        %1118 = vmatpush1.bf16.msra.mxu0 0
        %1119 = vmatprep.subr.bf16.mxu0 0
        %1120 = vmatpush1.bf16.msra.mxu0 0
        %1121 = vmatprep.subr.bf16.mxu0 0
        %1122 = vmatpush1.bf16.msra.mxu0 0
        %1123 = vmatprep.subr.bf16.mxu0 0
        %1124 = vmatpush1.bf16.msra.mxu0 0
        %1125 = vmatprep.subr.bf16.mxu0 0
        %1126 = vmatpush1.bf16.msra.mxu0 0
        %1127 = vmatprep.subr.bf16.mxu0 0
        %1128 = vmatpush1.bf16.msra.mxu0 0
        %1129 = vmatprep.mubr.bf16.mxu0 0
        %1130 = vmatmul.mubr.bf16.gmra.mrb[0].mxu0 %v1095
        %v1131 = vpop.f32.mrb[0].mxu0
        %v1132 = vadd.f32 0.0, %v1131
        %v1133 = vpop.f32.mrb[0].mxu0
        %v1134 = vpop.f32.mrb[0].mxu0
        %v1135 = vpop.f32.mrb[0].mxu0
        %1136 = vdwg.mxu0
        %v1137 = vadd.f32 %v1092, %v1132
        %v1138 = vxor.u32 %v1137, 2147483648
        %v1139 = vmul.f32 %v1138, 1.442695
        %v1140 = vpow.pop %v1139
        %v1141 = vadd.f32 %v1140, 1.0
        %v1142 = vrcp.pop %v1141
        %v1143 = vmul.f32 1.0, %v1142
        %v1144 = vtanh.pop %v1137
        %v1145 = vld [vmem:[#allocation4] sm:$0xff]
        %1147 = vrot.lane.b32.xlu0 %v1145, 32
        %v1148 = vpop.permute.xlu0 %1147
        %v1150 = vmul.f32 %v1143, %v1148
        %1152 = vrot.lane.b32.xlu0 %v1144, 64
        %v1153 = vpop.permute.xlu0 %1152
        %v1155 = vmul.f32 %v1143, %v1153
        %1157 = vrot.lane.b32.xlu0 %v1155, 32
        %v1158 = vpop.permute.xlu0 %1157
        %v1160 = vadd.f32 %v1150, %v1158
        %v1161 = vtanh.pop %v1160
        %1163 = vrot.lane.b32.xlu0 %v1161, 64
        %v1164 = vpop.permute.xlu0 %1163
        %v1166 = vmul.f32 %v1143, %v1164
        %1168 = vrot.lane.b32.xlu0 %v1166, 32
        %v1169 = vpop.permute.xlu0 %1168
        %1171 = vst.msk [vmem:[#allocation3] sm:$0xff] %vm343, %v1169
        %1173 = vrot.lane.b32.xlu0 %v1160, 96
        %v1174 = vpop.permute.xlu0 %1173
        %1176 = vst.msk [vmem:[#allocation4] sm:$0xff] %vm343, %v1174
        %s1177 = scalar_lea.vmem %s306, %s1089
        %1178 = vst.msk [vmem:[%s1177] sm:$0xff] %vm343, %v1169
        %v1179 = vld [vmem:[#allocation3] sm:$0xff]
        %1180 = vst.msk [vmem:[%s281] sm:$0xff] %vm343, %v1179
        %v1181 = vld [vmem:[#allocation4] sm:$0xff]
        %1182 = vst.msk [vmem:[%s288] sm:$0xff] %vm343, %v1181
        %p1183 = scmp.lt.s32.totalorder %s24, 1
        %s1184 = scalar_select %p1183, %s24, 1
        %s1185 = smul.addr %s1184, 8
        %s1186 = smul.addr %s1185, 8
        %s1187 = scalar_lea.vmem %s4, %s1186
        %s1188 = sand.u32 %s157, 1
        %s1189 = scalar_lea.sflag [#allocation6], %s1188
        %s1190 = sand.u32 %s157, 1
        %s1191 = smul.addr %s1190, 8
        %s1192 = scalar_lea.vmem [#allocation5], %s1191
        %s1193 = sand.u32 %s183, 1
        %s1194 = scalar_lea.sflag [#allocation8], %s1193
        %s1195 = sand.u32 %s183, 1
        %s1196 = smul.addr %s1195, 8
        %s1197 = scalar_lea.vmem [#allocation7], %s1196
        // Predicated region
        $region37: #{tpu_custom_call.1} parent=35 // pred_check
          %p1198 = pneg %p141
        $region38: #{tpu_custom_call.1} parent=35 // pred_check_branch
          %1200 = sbr.rel (%p1198) target = $region40
        $region39: #{tpu_custom_call.1} parent=35 // pred_region
          _
        $region40: #{tpu_custom_call.1} parent=35 // pred_fallthru
          _
        // Predicated region
        $region41: #{tpu_custom_call.1} parent=35 // pred_check
          %p1201 = pneg %p167
        $region42: #{tpu_custom_call.1} parent=35 // pred_check_branch
          %1203 = sbr.rel (%p1201) target = $region44
        $region43: #{tpu_custom_call.1} parent=35 // pred_region
          %s1205 = ssub.s32 128, 128
          %1206 = vsyncadd %s1189, %s1205
          %s1207 = smul.addr %s24, 128
          %s1208 = scalar_lea.hbm %s5, %s1207
          %s1210 = sshll.u32 %s1192, 4
          %s1211 = int_to_ptr.vmem [resolvable:$true] %s1210
          %1213 = dma.vmem_to_hbm [thread:$0]  %s1211, 128, %s1208, %s1189
        $region44: #{tpu_custom_call.1} parent=35 // pred_fallthru
          _
        // Predicated region
        $region45: #{tpu_custom_call.1} parent=35 // pred_check
          %p1214 = pneg %p193
        $region46: #{tpu_custom_call.1} parent=35 // pred_check_branch
          %1216 = sbr.rel (%p1214) target = $region48
        $region47: #{tpu_custom_call.1} parent=35 // pred_region
          %s1218 = ssub.s32 128, 128
          %1219 = vsyncadd %s1194, %s1218
          %s1220 = smul.addr %s24, 128
          %s1221 = scalar_lea.hbm %s6, %s1220
          %s1223 = sshll.u32 %s1197, 4
          %s1224 = int_to_ptr.vmem [resolvable:$true] %s1223
          %1226 = dma.vmem_to_hbm [thread:$0]  %s1224, 128, %s1221, %s1194
        $region48: #{tpu_custom_call.1} parent=35 // pred_fallthru
          _
      $region36: #{tpu_custom_call.1} parent=5 // pred_fallthru
        _
      %p1227 = scmp.le.s32.totalorder 2, %s19
      // Predicated region
      $region49: #{tpu_custom_call.1} parent=5 // pred_check
        %p1228 = pneg %p1227
      $region50: #{tpu_custom_call.1} parent=5 // pred_check_branch
        %1230 = sbr.rel (%p1228) target = $region52
      $region51: #{tpu_custom_call.1} parent=5 // pred_region
        %s1231 = ssub.s32 %s19, 2
        // Predicated region
        $region53: #{tpu_custom_call.1} parent=51 // pred_check
          %p1232 = pneg %p147
        $region54: #{tpu_custom_call.1} parent=51 // pred_check_branch
          %1234 = sbr.rel (%p1232) target = $region56
        $region55: #{tpu_custom_call.1} parent=51 // pred_region
          %p1235 = scmp.lt.s32.totalorder %s25, 1
          %s1236 = scalar_select %p1235, %s25, 1
          %s1237 = smul.addr %s1236, 8
          %s1238 = smul.addr %s1237, 8
          %s1239 = scalar_lea.vmem %s4, %s1238
        $region56: #{tpu_custom_call.1} parent=51 // pred_fallthru
          _
        // Predicated region
        $region57: #{tpu_custom_call.1} parent=51 // pred_check
          %p1240 = pneg %p173
        $region58: #{tpu_custom_call.1} parent=51 // pred_check_branch
          %1242 = sbr.rel (%p1240) target = $region60
        $region59: #{tpu_custom_call.1} parent=51 // pred_region
          %s1243 = sand.u32 %s158, 1
          %s1244 = scalar_lea.sflag [#allocation6], %s1243
          %s1245 = sand.u32 %s158, 1
          %s1246 = smul.addr %s1245, 8
          %s1247 = scalar_lea.vmem [#allocation5], %s1246
          %1248 = dma.done %s1244, 128
        $region60: #{tpu_custom_call.1} parent=51 // pred_fallthru
          _
        // Predicated region
        $region61: #{tpu_custom_call.1} parent=51 // pred_check
          %p1249 = pneg %p199
        $region62: #{tpu_custom_call.1} parent=51 // pred_check_branch
          %1251 = sbr.rel (%p1249) target = $region64
        $region63: #{tpu_custom_call.1} parent=51 // pred_region
          %s1252 = sand.u32 %s184, 1
          %s1253 = scalar_lea.sflag [#allocation8], %s1252
          %s1254 = sand.u32 %s184, 1
          %s1255 = smul.addr %s1254, 8
          %s1256 = scalar_lea.vmem [#allocation7], %s1255
          %1257 = dma.done %s1253, 128
        $region64: #{tpu_custom_call.1} parent=51 // pred_fallthru
          _
      $region52: #{tpu_custom_call.1} parent=5 // pred_fallthru
        _
    $region6: #{tpu_custom_call.1} parent=1 // loop_footer
      %s23 = sadd.s32 1, %s19
    $region7: #{tpu_custom_call.1} parent=1 // loop_footer_branch
      %18 = sbr.rel target = $region3
    $region8: #{tpu_custom_call.1} parent=1 // loop_exit
      _
    %1258 = vsyncpa [#allocation6], 1
    %s1259 = scalar_lea.sflag [#allocation6], 1
    %1260 = vsyncpa %s1259, 1
    %1261 = vsyncpa [#allocation8], 1
    %s1262 = scalar_lea.sflag [#allocation8], 1
    %1263 = vsyncpa %s1262, 1

</llo_original>
